<compile_context>
chip_gen: v7x
topology: tpu7x:2x2x1
jax: 0.10.0
libtpu: 0.0.40
codegen_flags: <defaults>
</compile_context>

<pallas_src>
import numpy as np

import jax
import jax.numpy as jnp
from jax.experimental import pallas as pl
from jax.experimental.pallas import tpu as pltpu


# ----------------------------- Pallas kernel --------------------------------

def _branch_kernel(x_ref, w1_ref, b1_ref, w2_ref, b2_ref, w3_ref, b3_ref,
                   fc1w_ref, fc1b_ref, fc2w_ref, fc2b_ref, out_ref):
    """Full conv tower for one image branch (grid step = branch).

    Activations are 2-D slabs: rows ordered (h, b), lanes ordered (w, c)
    (conv outputs use [even-w | odd-w] column order so pooling is a half-split
    maximum).  All intermediates stay in VMEM/vregs; only (B, 10) logits are
    stored.
    """
    bsz = out_ref.shape[1]

    # conv1 (1->32, 3x3) as ONE fused band matmul: (12B, 42) @ (42, 384).
    y = jnp.dot(x_ref[0], w1_ref[0], preferred_element_type=jnp.float32) + b1_ref[0]
    # fused MaxPool2x2 + ReLU:
    #   lane halves are [even w | odd w]  -> one elementwise maximum
    #   row pairs are B-row blocks (period 2B) -> reshape + half-split maximum
    y = jnp.maximum(y[:, :192], y[:, 192:])                      # (12B, 192)
    y = y.reshape(6, 2 * bsz, 192)
    p1 = jnp.maximum(jnp.maximum(y[:, :bsz, :], y[:, bsz:, :]),
                     0.0).reshape(6 * bsz, 192)                  # (6B, 192)

    # conv2 (32->32, 3x3): 3 row-banded matmuls, K=192, N=128.
    w2 = w2_ref[0]                                               # (3, 192, 128)
    acc = jnp.dot(p1[0:4 * bsz, :], w2[0], preferred_element_type=jnp.float32)
    acc = acc + jnp.dot(p1[bsz:5 * bsz, :], w2[1], preferred_element_type=jnp.float32)
    acc = acc + jnp.dot(p1[2 * bsz:6 * bsz, :], w2[2], preferred_element_type=jnp.float32)
    y = acc + b2_ref[0]                                          # (4B, 128)
    y = jnp.maximum(y[:, :64], y[:, 64:])                        # (4B, 64)
    y = y.reshape(2, 2 * bsz, 64)
    p2 = jnp.maximum(jnp.maximum(y[:, :bsz, :], y[:, bsz:, :]),
                     0.0).reshape(2 * bsz, 64)                   # (2B, 64)

    # conv3 (32->64, 2x2) == two K=64 matmuls over the two spatial rows + ReLU
    w3 = w3_ref[0]                                               # (2, 64, 64)
    h = (jnp.dot(p2[0:bsz, :], w3[0], preferred_element_type=jnp.float32)
         + jnp.dot(p2[bsz:2 * bsz, :], w3[1], preferred_element_type=jnp.float32)
         + b3_ref[0])
    h = jnp.maximum(h, 0.0)                                      # (B, 64)

    # Flatten -> Linear(64, H) + ReLU -> Linear(H, 10), batched with M=B.
    h = jnp.maximum(jnp.dot(h, fc1w_ref[0], preferred_element_type=jnp.float32)
                    + fc1b_ref[0], 0.0)
    out_ref[0] = (jnp.dot(h, fc2w_ref[0], preferred_element_type=jnp.float32)
                  + fc2b_ref[0])                                 # (B, 10)


# ----------------------------- forward wrapper ------------------------------

def _conv1_slab(x):
    """x: (B, 2, 14, 14) NCHW pair -> (2, 12*B, 42) conv1 input slab.

    Rows ordered (output-row oh, batch b); lanes ordered (kernel-row ki, w).
    Built once in XLA so conv1 is a single fused matmul in the kernel.
    """
    bsz = x.shape[0]
    xb = jnp.transpose(x, (1, 2, 0, 3))                          # (2, 14, B, 14)
    slab = jnp.concatenate([xb[:, ki:ki + 12] for ki in range(3)], axis=-1)
    return slab.reshape(2, 12 * bsz, 42)


def deep_model_forward(x, packed):
    """x: (B, 2, 14, 14) NCHW -> (pred (B,2), img_1_pred (B,10), img_2_pred (B,10))."""
    B = x.shape[0]
    nbh = packed["fc1_w"].shape[-1]
    slab = _conv1_slab(x)

    weight_keys = ("w1", "b1", "w2", "b2", "w3", "b3",
                   "fc1_w", "fc1_b", "fc2_w", "fc2_b")
    weights = [packed[k] for k in weight_keys]

    def branch_spec(arr):
        rest_zeros = (0,) * (arr.ndim - 1)
        return pl.BlockSpec((1,) + tuple(arr.shape[1:]),
                            lambda i: (i,) + rest_zeros)

    flops = 2 * 2 * B * (12 * 42 * 384 + 3 * 4 * 192 * 128 + 2 * 64 * 64
                         + 64 * nbh + nbh * 10)
    bytes_accessed = 4 * (int(slab.size) + sum(int(w.size) for w in weights)
                          + 2 * B * 10)

    labels = pl.pallas_call(
        _branch_kernel,
        out_shape=jax.ShapeDtypeStruct((2, B, 10), jnp.float32),
        grid=(2,),
        in_specs=[branch_spec(slab)] + [branch_spec(w) for w in weights],
        out_specs=pl.BlockSpec((1, B, 10), lambda i: (i, 0, 0)),
        compiler_params=pltpu.CompilerParams(dimension_semantics=("parallel",)),
        cost_estimate=pl.CostEstimate(flops=int(flops), transcendentals=0,
                                      bytes_accessed=int(bytes_accessed)),
    )(slab, *weights)

    img_1_pred, img_2_pred = labels[0], labels[1]
    # comp head = Sequential(ReLU(), Linear(20, 2)) on concat(img_1, img_2).
    # Kept in plain XLA: a (B,20)@(20,2) matmul is dwarfed by pallas launch
    # overhead, and doing it here keeps the single grid=(2,) call "parallel"
    # so v7x can run one branch per TensorCore.
    z = jnp.maximum(jnp.concatenate([img_1_pred, img_2_pred], axis=1), 0.0)
    pred = z @ packed["comp_w"] + packed["comp_b"]
    return pred, img_1_pred, img_2_pred


# ----------------------------- parameter handling ---------------------------

def _branch_params(key, nb_hidden):
    ks = jax.random.split(key, 10)

    def n(k, shape, scale=0.1):
        return jax.random.normal(k, shape, dtype=jnp.float32) * scale

    return {
        # conv weights in PyTorch (OC, IC, kh, kw) layout
        "w1": n(ks[0], (32, 1, 3, 3)),  "b1": n(ks[1], (32,)),
        "w2": n(ks[2], (32, 32, 3, 3)), "b2": n(ks[3], (32,)),
        "w3": n(ks[4], (64, 32, 2, 2)), "b3": n(ks[5], (64,)),
        # fc weights stored pre-transposed as (in, out)
        "fc1_w": n(ks[6], (64, nb_hidden)), "fc1_b": n(ks[7], (nb_hidden,)),
        "fc2_w": n(ks[8], (nb_hidden, 10)), "fc2_b": n(ks[9], (10,)),
    }


def init_params(key, nb_hidden):
    return {
        "conv1": _branch_params(jax.random.fold_in(key, 1), nb_hidden),
        "conv2": _branch_params(jax.random.fold_in(key, 2), nb_hidden),
        "comp_w": jax.random.normal(jax.random.fold_in(key, 3), (20, 2),
                                    dtype=jnp.float32) * 0.1,
        "comp_b": jax.random.normal(jax.random.fold_in(key, 4), (2,),
                                    dtype=jnp.float32) * 0.1,
    }


def _conv_row_bands(w, in_w, fuse_kh):
    """PyTorch conv weight (OC, IC, KH, KW) -> row-banded matmul matrices.

    Maps one input row (lanes ordered (w, ic)) to one output row whose columns
    are ordered [even output-w block | odd output-w block] (channels contiguous
    within each w), so a width-2 maxpool becomes a single half-split maximum in
    the kernel.  Returns (KH, in_w*IC, out_w*OC); if fuse_kh, the KH bands are
    stacked along rows -> (KH*in_w*IC, out_w*OC) for a single fused matmul.
    """
    w = np.asarray(w, np.float32)
    oc, ic, kh, kw = w.shape
    out_w = in_w - kw + 1
    w_order = list(range(0, out_w, 2)) + list(range(1, out_w, 2))
    col_of = {wj: c for c, wj in enumerate(w_order)}
    bands = np.zeros((kh, in_w * ic, out_w * oc), np.float32)
    for ki in range(kh):
        for j in range(out_w):
            cj = col_of[j]
            for kj in range(kw):
                bands[ki, (j + kj) * ic:(j + kj + 1) * ic,
                      cj * oc:(cj + 1) * oc] = w[:, :, ki, kj].T
    if fuse_kh:
        return bands.reshape(kh * in_w * ic, out_w * oc)
    return bands


def pack_params(params):
    """One-time host-side repack of PyTorch-layout params into the stacked,
    kernel-ready layout (leading axis = branch)."""
    def one(p):
        return {
            "w1": _conv_row_bands(p["w1"], 14, fuse_kh=True),             # (42, 384)
            "b1": np.tile(np.asarray(p["b1"], np.float32), 12)[None, :],  # (1, 384)
            "w2": _conv_row_bands(p["w2"], 6, fuse_kh=False),             # (3, 192, 128)
            "b2": np.tile(np.asarray(p["b2"], np.float32), 4)[None, :],   # (1, 128)
            # conv3 weight split by kernel row: (kh, kw*ic, oc) = (2, 64, 64)
            "w3": np.transpose(np.asarray(p["w3"], np.float32),
                               (2, 3, 1, 0)).reshape(2, 2 * 32, 64),
            "b3": np.asarray(p["b3"], np.float32)[None, :],               # (1, 64)
            "fc1_w": np.asarray(p["fc1_w"], np.float32),
            "fc1_b": np.asarray(p["fc1_b"], np.float32)[None, :],
            "fc2_w": np.asarray(p["fc2_w"], np.float32),
            "fc2_b": np.asarray(p["fc2_b"], np.float32)[None, :],
        }

    br0, br1 = one(params["conv1"]), one(params["conv2"])
    packed = {k: jnp.asarray(np.stack([br0[k], br1[k]], axis=0)) for k in br0}
    packed["comp_w"] = jnp.asarray(params["comp_w"])
    packed["comp_b"] = jnp.asarray(params["comp_b"]).reshape(1, 2)
    return packed


# ----------------------------- pure-JAX reference ---------------------------

def _ref_forward(x, params):
    """Pure-JAX (XLA) reference of the PyTorch forward, used for validation."""
    def conv(h, w, b):
        B, C, H, W = h.shape
        OC, _, kh, kw = w.shape
        OH, OW = H - kh + 1, W - kw + 1
        cols = jnp.stack([h[:, :, i:i + OH, j:j + OW]
                          for i in range(kh) for j in range(kw)], axis=2)
        cols = cols.reshape(B, C * kh * kw, OH, OW)
        out = jnp.einsum("ok,bkhw->bohw", w.reshape(OC, C * kh * kw), cols)
        return out + b[None, :, None, None]

    def pool_relu(h):
        B, C, H, W = h.shape
        h = jnp.max(h.reshape(B, C, H // 2, 2, W // 2, 2), axis=(3, 5))
        return jnp.maximum(h, 0.0)

    def branch(img, p):
        h = pool_relu(conv(img, p["w1"], p["b1"]))
        h = pool_relu(conv(h, p["w2"], p["b2"]))
        h = jnp.maximum(conv(h, p["w3"], p["b3"]), 0.0).reshape(img.shape[0], -1)
        h = jnp.maximum(h @ p["fc1_w"] + p["fc1_b"], 0.0)
        return h @ p["fc2_w"] + p["fc2_b"]

    i1 = branch(x[:, 0:1], params["conv1"])
    i2 = branch(x[:, 1:2], params["conv2"])
    labels = jnp.concatenate([i1, i2], axis=1)
    pred = jnp.maximum(labels, 0.0) @ params["comp_w"] + params["comp_b"]
    return pred, i1, i2


# TODO(synk): train_model (SGD loop, CrossEntropyLoss, auxiliary loss weighting)
# is training-time code, not part of the forward pass, and is not implemented.

if __name__ == "__main__":
    key = jax.random.PRNGKey(0)
    kx, kp = jax.random.split(key)

    nb_hidden = 64                     # small hidden size (module default is 200)
    params = init_params(kp, nb_hidden)
    packed = pack_params(params)       # one-time repack into kernel layout

    batch = 2
    x = jax.random.normal(kx, (batch, 2, 14, 14), dtype=jnp.float32)  # NCHW pair images

    fwd = jax.jit(deep_model_forward)
    pred, img_1_pred, img_2_pred = fwd(x, packed)
    jax.block_until_ready((pred, img_1_pred, img_2_pred))

    assert pred.shape == (batch, 2) and pred.dtype == jnp.float32
    assert img_1_pred.shape == (batch, 10)
    assert img_2_pred.shape == (batch, 10)

    # validate against a pure-JAX reference of the PyTorch forward
    ref_pred, ref_i1, ref_i2 = _ref_forward(x, params)
    np.testing.assert_allclose(np.asarray(pred), np.asarray(ref_pred), rtol=5e-2, atol=1e-2)
    np.testing.assert_allclose(np.asarray(img_1_pred), np.asarray(ref_i1), rtol=5e-2, atol=1e-2)
    np.testing.assert_allclose(np.asarray(img_2_pred), np.asarray(ref_i2), rtol=5e-2, atol=1e-2)

    print("KERNEL_OK")
</pallas_src>

<mosaic_0001>
module attributes {stable_mosaic.version = 11 : i64} {
  func.func @_branch_kernel(%arg0: i32, %arg1: memref<1x24x42xf32, #tpu.memory_space<vmem>>, %arg2: memref<1x42x384xf32, #tpu.memory_space<vmem>>, %arg3: memref<1x1x384xf32, #tpu.memory_space<vmem>>, %arg4: memref<1x3x192x128xf32, #tpu.memory_space<vmem>>, %arg5: memref<1x1x128xf32, #tpu.memory_space<vmem>>, %arg6: memref<1x2x64x64xf32, #tpu.memory_space<vmem>>, %arg7: memref<1x1x64xf32, #tpu.memory_space<vmem>>, %arg8: memref<1x64x64xf32, #tpu.memory_space<vmem>>, %arg9: memref<1x1x64xf32, #tpu.memory_space<vmem>>, %arg10: memref<1x64x10xf32, #tpu.memory_space<vmem>>, %arg11: memref<1x1x10xf32, #tpu.memory_space<vmem>>, %arg12: memref<1x2x10xf32, #tpu.memory_space<vmem>>) attributes {dimension_semantics = [#tpu.dimension_semantics<parallel>], iteration_bounds = array<i64: 2>, scalar_prefetch = 0 : i64, scratch_operands = 0 : i64, tpu.core_type = #tpu.core_type<tc>, window_params = [{transform_indices = @transform_0, window_bounds = array<i64: 1, 24, 42>}, {transform_indices = @transform_1, window_bounds = array<i64: 1, 42, 384>}, {transform_indices = @transform_2, window_bounds = array<i64: 1, 1, 384>}, {transform_indices = @transform_3, window_bounds = array<i64: 1, 3, 192, 128>}, {transform_indices = @transform_4, window_bounds = array<i64: 1, 1, 128>}, {transform_indices = @transform_5, window_bounds = array<i64: 1, 2, 64, 64>}, {transform_indices = @transform_6, window_bounds = array<i64: 1, 1, 64>}, {transform_indices = @transform_7, window_bounds = array<i64: 1, 64, 64>}, {transform_indices = @transform_8, window_bounds = array<i64: 1, 1, 64>}, {transform_indices = @transform_9, window_bounds = array<i64: 1, 64, 10>}, {transform_indices = @transform_10, window_bounds = array<i64: 1, 1, 10>}, {transform_indices = @transform_11, window_bounds = array<i64: 1, 2, 10>}]} {
    %c0 = arith.constant 0 : index
    %c0_0 = arith.constant 0 : index
    %c0_1 = arith.constant 0 : index
    %0 = vector.load %arg1[%c0, %c0_0, %c0_1] : memref<1x24x42xf32, #tpu.memory_space<vmem>>, vector<1x24x42xf32>
    %1 = vector.shape_cast %0 : vector<1x24x42xf32> to vector<24x42xf32>
    %c0_2 = arith.constant 0 : index
    %c0_3 = arith.constant 0 : index
    %c0_4 = arith.constant 0 : index
    %2 = vector.load %arg2[%c0_2, %c0_3, %c0_4] : memref<1x42x384xf32, #tpu.memory_space<vmem>>, vector<1x42x384xf32>
    %3 = vector.shape_cast %2 : vector<1x42x384xf32> to vector<42x384xf32>
    %cst = arith.constant dense<0.000000e+00> : vector<24x384xf32>
    %4 = tpu.matmul %1, %3, %cst {dimension_numbers = #tpu.dot_dimension_numbers<[1], [0], [0], [1], [0, 0, 1, 1], [], []>} : vector<24x42xf32>, vector<42x384xf32>, vector<24x384xf32> -> vector<24x384xf32>
    %c0_5 = arith.constant 0 : index
    %c0_6 = arith.constant 0 : index
    %c0_7 = arith.constant 0 : index
    %5 = vector.load %arg3[%c0_5, %c0_6, %c0_7] : memref<1x1x384xf32, #tpu.memory_space<vmem>>, vector<1x1x384xf32>
    %6 = vector.shape_cast %5 : vector<1x1x384xf32> to vector<1x384xf32>
    %7 = vector.broadcast %6 : vector<1x384xf32> to vector<24x384xf32>
    %8 = arith.addf %4, %7 : vector<24x384xf32>
    %9 = vector.extract_strided_slice %8 {offsets = [0, 0], sizes = [24, 192], strides = [1, 1]} : vector<24x384xf32> to vector<24x192xf32>
    %10 = vector.extract_strided_slice %8 {offsets = [0, 192], sizes = [24, 192], strides = [1, 1]} : vector<24x384xf32> to vector<24x192xf32>
    %11 = arith.maximumf %9, %10 : vector<24x192xf32>
    %12 = vector.shape_cast %11 : vector<24x192xf32> to vector<6x4x192xf32>
    %13 = vector.extract_strided_slice %12 {offsets = [0, 0, 0], sizes = [6, 2, 192], strides = [1, 1, 1]} : vector<6x4x192xf32> to vector<6x2x192xf32>
    %14 = vector.extract_strided_slice %12 {offsets = [0, 2, 0], sizes = [6, 2, 192], strides = [1, 1, 1]} : vector<6x4x192xf32> to vector<6x2x192xf32>
    %15 = arith.maximumf %13, %14 : vector<6x2x192xf32>
    %cst_8 = arith.constant 0.000000e+00 : f32
    %16 = vector.broadcast %cst_8 : f32 to vector<6x2x192xf32>
    %17 = arith.maximumf %15, %16 : vector<6x2x192xf32>
    %18 = vector.shape_cast %17 : vector<6x2x192xf32> to vector<12x192xf32>
    %c0_9 = arith.constant 0 : index
    %c0_10 = arith.constant 0 : index
    %c0_11 = arith.constant 0 : index
    %c0_12 = arith.constant 0 : index
    %19 = vector.load %arg4[%c0_9, %c0_10, %c0_11, %c0_12] : memref<1x3x192x128xf32, #tpu.memory_space<vmem>>, vector<1x3x192x128xf32>
    %20 = vector.shape_cast %19 : vector<1x3x192x128xf32> to vector<3x192x128xf32>
    %21 = vector.extract_strided_slice %18 {offsets = [0, 0], sizes = [8, 192], strides = [1, 1]} : vector<12x192xf32> to vector<8x192xf32>
    %22 = vector.extract_strided_slice %20 {offsets = [0, 0, 0], sizes = [1, 192, 128], strides = [1, 1, 1]} : vector<3x192x128xf32> to vector<1x192x128xf32>
    %23 = vector.shape_cast %22 : vector<1x192x128xf32> to vector<192x128xf32>
    %cst_13 = arith.constant dense<0.000000e+00> : vector<8x128xf32>
    %24 = tpu.matmul %21, %23, %cst_13 {dimension_numbers = #tpu.dot_dimension_numbers<[1], [0], [0], [1], [0, 0, 1, 1], [], []>} : vector<8x192xf32>, vector<192x128xf32>, vector<8x128xf32> -> vector<8x128xf32>
    %25 = vector.extract_strided_slice %18 {offsets = [2, 0], sizes = [8, 192], strides = [1, 1]} : vector<12x192xf32> to vector<8x192xf32>
    %26 = vector.extract_strided_slice %20 {offsets = [1, 0, 0], sizes = [1, 192, 128], strides = [1, 1, 1]} : vector<3x192x128xf32> to vector<1x192x128xf32>
    %27 = vector.shape_cast %26 : vector<1x192x128xf32> to vector<192x128xf32>
    %cst_14 = arith.constant dense<0.000000e+00> : vector<8x128xf32>
    %28 = tpu.matmul %25, %27, %cst_14 {dimension_numbers = #tpu.dot_dimension_numbers<[1], [0], [0], [1], [0, 0, 1, 1], [], []>} : vector<8x192xf32>, vector<192x128xf32>, vector<8x128xf32> -> vector<8x128xf32>
    %29 = arith.addf %24, %28 : vector<8x128xf32>
    %30 = vector.extract_strided_slice %18 {offsets = [4, 0], sizes = [8, 192], strides = [1, 1]} : vector<12x192xf32> to vector<8x192xf32>
    %31 = vector.extract_strided_slice %20 {offsets = [2, 0, 0], sizes = [1, 192, 128], strides = [1, 1, 1]} : vector<3x192x128xf32> to vector<1x192x128xf32>
    %32 = vector.shape_cast %31 : vector<1x192x128xf32> to vector<192x128xf32>
    %cst_15 = arith.constant dense<0.000000e+00> : vector<8x128xf32>
    %33 = tpu.matmul %30, %32, %cst_15 {dimension_numbers = #tpu.dot_dimension_numbers<[1], [0], [0], [1], [0, 0, 1, 1], [], []>} : vector<8x192xf32>, vector<192x128xf32>, vector<8x128xf32> -> vector<8x128xf32>
    %34 = arith.addf %29, %33 : vector<8x128xf32>
    %c0_16 = arith.constant 0 : index
    %c0_17 = arith.constant 0 : index
    %c0_18 = arith.constant 0 : index
    %35 = vector.load %arg5[%c0_16, %c0_17, %c0_18] : memref<1x1x128xf32, #tpu.memory_space<vmem>>, vector<1x1x128xf32>
    %36 = vector.shape_cast %35 : vector<1x1x128xf32> to vector<1x128xf32>
    %37 = vector.broadcast %36 : vector<1x128xf32> to vector<8x128xf32>
    %38 = arith.addf %34, %37 : vector<8x128xf32>
    %39 = vector.extract_strided_slice %38 {offsets = [0, 0], sizes = [8, 64], strides = [1, 1]} : vector<8x128xf32> to vector<8x64xf32>
    %40 = vector.extract_strided_slice %38 {offsets = [0, 64], sizes = [8, 64], strides = [1, 1]} : vector<8x128xf32> to vector<8x64xf32>
    %41 = arith.maximumf %39, %40 : vector<8x64xf32>
    %42 = vector.shape_cast %41 : vector<8x64xf32> to vector<2x4x64xf32>
    %43 = vector.extract_strided_slice %42 {offsets = [0, 0, 0], sizes = [2, 2, 64], strides = [1, 1, 1]} : vector<2x4x64xf32> to vector<2x2x64xf32>
    %44 = vector.extract_strided_slice %42 {offsets = [0, 2, 0], sizes = [2, 2, 64], strides = [1, 1, 1]} : vector<2x4x64xf32> to vector<2x2x64xf32>
    %45 = arith.maximumf %43, %44 : vector<2x2x64xf32>
    %cst_19 = arith.constant 0.000000e+00 : f32
    %46 = vector.broadcast %cst_19 : f32 to vector<2x2x64xf32>
    %47 = arith.maximumf %45, %46 : vector<2x2x64xf32>
    %48 = vector.shape_cast %47 : vector<2x2x64xf32> to vector<4x64xf32>
    %c0_20 = arith.constant 0 : index
    %c0_21 = arith.constant 0 : index
    %c0_22 = arith.constant 0 : index
    %c0_23 = arith.constant 0 : index
    %49 = vector.load %arg6[%c0_20, %c0_21, %c0_22, %c0_23] : memref<1x2x64x64xf32, #tpu.memory_space<vmem>>, vector<1x2x64x64xf32>
    %50 = vector.shape_cast %49 : vector<1x2x64x64xf32> to vector<2x64x64xf32>
    %51 = vector.extract_strided_slice %48 {offsets = [0, 0], sizes = [2, 64], strides = [1, 1]} : vector<4x64xf32> to vector<2x64xf32>
    %52 = vector.extract_strided_slice %50 {offsets = [0, 0, 0], sizes = [1, 64, 64], strides = [1, 1, 1]} : vector<2x64x64xf32> to vector<1x64x64xf32>
    %53 = vector.shape_cast %52 : vector<1x64x64xf32> to vector<64x64xf32>
    %cst_24 = arith.constant dense<0.000000e+00> : vector<2x64xf32>
    %54 = tpu.matmul %51, %53, %cst_24 {dimension_numbers = #tpu.dot_dimension_numbers<[1], [0], [0], [1], [0, 0, 1, 1], [], []>} : vector<2x64xf32>, vector<64x64xf32>, vector<2x64xf32> -> vector<2x64xf32>
    %55 = vector.extract_strided_slice %48 {offsets = [2, 0], sizes = [2, 64], strides = [1, 1]} : vector<4x64xf32> to vector<2x64xf32>
    %56 = vector.extract_strided_slice %50 {offsets = [1, 0, 0], sizes = [1, 64, 64], strides = [1, 1, 1]} : vector<2x64x64xf32> to vector<1x64x64xf32>
    %57 = vector.shape_cast %56 : vector<1x64x64xf32> to vector<64x64xf32>
    %cst_25 = arith.constant dense<0.000000e+00> : vector<2x64xf32>
    %58 = tpu.matmul %55, %57, %cst_25 {dimension_numbers = #tpu.dot_dimension_numbers<[1], [0], [0], [1], [0, 0, 1, 1], [], []>} : vector<2x64xf32>, vector<64x64xf32>, vector<2x64xf32> -> vector<2x64xf32>
    %59 = arith.addf %54, %58 : vector<2x64xf32>
    %c0_26 = arith.constant 0 : index
    %c0_27 = arith.constant 0 : index
    %c0_28 = arith.constant 0 : index
    %60 = vector.load %arg7[%c0_26, %c0_27, %c0_28] : memref<1x1x64xf32, #tpu.memory_space<vmem>>, vector<1x1x64xf32>
    %61 = vector.shape_cast %60 : vector<1x1x64xf32> to vector<1x64xf32>
    %62 = vector.broadcast %61 : vector<1x64xf32> to vector<2x64xf32>
    %63 = arith.addf %59, %62 : vector<2x64xf32>
    %cst_29 = arith.constant 0.000000e+00 : f32
    %64 = vector.broadcast %cst_29 : f32 to vector<2x64xf32>
    %65 = arith.maximumf %63, %64 : vector<2x64xf32>
    %c0_30 = arith.constant 0 : index
    %c0_31 = arith.constant 0 : index
    %c0_32 = arith.constant 0 : index
    %66 = vector.load %arg8[%c0_30, %c0_31, %c0_32] : memref<1x64x64xf32, #tpu.memory_space<vmem>>, vector<1x64x64xf32>
    %67 = vector.shape_cast %66 : vector<1x64x64xf32> to vector<64x64xf32>
    %cst_33 = arith.constant dense<0.000000e+00> : vector<2x64xf32>
    %68 = tpu.matmul %65, %67, %cst_33 {dimension_numbers = #tpu.dot_dimension_numbers<[1], [0], [0], [1], [0, 0, 1, 1], [], []>} : vector<2x64xf32>, vector<64x64xf32>, vector<2x64xf32> -> vector<2x64xf32>
    %c0_34 = arith.constant 0 : index
    %c0_35 = arith.constant 0 : index
    %c0_36 = arith.constant 0 : index
    %69 = vector.load %arg9[%c0_34, %c0_35, %c0_36] : memref<1x1x64xf32, #tpu.memory_space<vmem>>, vector<1x1x64xf32>
    %70 = vector.shape_cast %69 : vector<1x1x64xf32> to vector<1x64xf32>
    %71 = vector.broadcast %70 : vector<1x64xf32> to vector<2x64xf32>
    %72 = arith.addf %68, %71 : vector<2x64xf32>
    %cst_37 = arith.constant 0.000000e+00 : f32
    %73 = vector.broadcast %cst_37 : f32 to vector<2x64xf32>
    %74 = arith.maximumf %72, %73 : vector<2x64xf32>
    %c0_38 = arith.constant 0 : index
    %c0_39 = arith.constant 0 : index
    %c0_40 = arith.constant 0 : index
    %75 = vector.load %arg10[%c0_38, %c0_39, %c0_40] : memref<1x64x10xf32, #tpu.memory_space<vmem>>, vector<1x64x10xf32>
    %76 = vector.shape_cast %75 : vector<1x64x10xf32> to vector<64x10xf32>
    %cst_41 = arith.constant dense<0.000000e+00> : vector<2x10xf32>
    %77 = tpu.matmul %74, %76, %cst_41 {dimension_numbers = #tpu.dot_dimension_numbers<[1], [0], [0], [1], [0, 0, 1, 1], [], []>} : vector<2x64xf32>, vector<64x10xf32>, vector<2x10xf32> -> vector<2x10xf32>
    %c0_42 = arith.constant 0 : index
    %c0_43 = arith.constant 0 : index
    %c0_44 = arith.constant 0 : index
    %78 = vector.load %arg11[%c0_42, %c0_43, %c0_44] : memref<1x1x10xf32, #tpu.memory_space<vmem>>, vector<1x1x10xf32>
    %79 = vector.shape_cast %78 : vector<1x1x10xf32> to vector<1x10xf32>
    %80 = vector.broadcast %79 : vector<1x10xf32> to vector<2x10xf32>
    %81 = arith.addf %77, %80 : vector<2x10xf32>
    %c0_45 = arith.constant 0 : index
    %c0_46 = arith.constant 0 : index
    %c0_47 = arith.constant 0 : index
    %82 = vector.load %arg12[%c0_45, %c0_46, %c0_47] : memref<1x2x10xf32, #tpu.memory_space<vmem>>, vector<1x2x10xf32>
    %83 = vector.shape_cast %82 : vector<1x2x10xf32> to vector<2x10xf32>
    %84 = vector.shape_cast %81 : vector<2x10xf32> to vector<1x2x10xf32>
    tpu.vector_store %arg12[%c0_45, %c0_46, %c0_47], %84 {strides = array<i32>} : memref<1x2x10xf32, #tpu.memory_space<vmem>>, vector<1x2x10xf32>,
    return
  }
  func.func @transform_0(%arg0: i32) -> (i32, i32, i32) {
    %c0_i32 = arith.constant 0 : i32
    %c0_i32_0 = arith.constant 0 : i32
    %c0_i32_1 = arith.constant 0 : i32
    return %arg0, %c0_i32, %c0_i32_0 : i32, i32, i32
  }
  func.func @transform_1(%arg0: i32) -> (i32, i32, i32) {
    %c0_i32 = arith.constant 0 : i32
    %c0_i32_0 = arith.constant 0 : i32
    %c0_i32_1 = arith.constant 0 : i32
    return %arg0, %c0_i32, %c0_i32_0 : i32, i32, i32
  }
  func.func @transform_2(%arg0: i32) -> (i32, i32, i32) {
    %c0_i32 = arith.constant 0 : i32
    %c0_i32_0 = arith.constant 0 : i32
    %c0_i32_1 = arith.constant 0 : i32
    return %arg0, %c0_i32, %c0_i32_0 : i32, i32, i32
  }
  func.func @transform_3(%arg0: i32) -> (i32, i32, i32, i32) {
    %c0_i32 = arith.constant 0 : i32
    %c0_i32_0 = arith.constant 0 : i32
    %c0_i32_1 = arith.constant 0 : i32
    %c0_i32_2 = arith.constant 0 : i32
    return %arg0, %c0_i32, %c0_i32_0, %c0_i32_1 : i32, i32, i32, i32
  }
  func.func @transform_4(%arg0: i32) -> (i32, i32, i32) {
    %c0_i32 = arith.constant 0 : i32
    %c0_i32_0 = arith.constant 0 : i32
    %c0_i32_1 = arith.constant 0 : i32
    return %arg0, %c0_i32, %c0_i32_0 : i32, i32, i32
  }
  func.func @transform_5(%arg0: i32) -> (i32, i32, i32, i32) {
    %c0_i32 = arith.constant 0 : i32
    %c0_i32_0 = arith.constant 0 : i32
    %c0_i32_1 = arith.constant 0 : i32
    %c0_i32_2 = arith.constant 0 : i32
    return %arg0, %c0_i32, %c0_i32_0, %c0_i32_1 : i32, i32, i32, i32
  }
  func.func @transform_6(%arg0: i32) -> (i32, i32, i32) {
    %c0_i32 = arith.constant 0 : i32
    %c0_i32_0 = arith.constant 0 : i32
    %c0_i32_1 = arith.constant 0 : i32
    return %arg0, %c0_i32, %c0_i32_0 : i32, i32, i32
  }
  func.func @transform_7(%arg0: i32) -> (i32, i32, i32) {
    %c0_i32 = arith.constant 0 : i32
    %c0_i32_0 = arith.constant 0 : i32
    %c0_i32_1 = arith.constant 0 : i32
    return %arg0, %c0_i32, %c0_i32_0 : i32, i32, i32
  }
  func.func @transform_8(%arg0: i32) -> (i32, i32, i32) {
    %c0_i32 = arith.constant 0 : i32
    %c0_i32_0 = arith.constant 0 : i32
    %c0_i32_1 = arith.constant 0 : i32
    return %arg0, %c0_i32, %c0_i32_0 : i32, i32, i32
  }
  func.func @transform_9(%arg0: i32) -> (i32, i32, i32) {
    %c0_i32 = arith.constant 0 : i32
    %c0_i32_0 = arith.constant 0 : i32
    %c0_i32_1 = arith.constant 0 : i32
    return %arg0, %c0_i32, %c0_i32_0 : i32, i32, i32
  }
  func.func @transform_10(%arg0: i32) -> (i32, i32, i32) {
    %c0_i32 = arith.constant 0 : i32
    %c0_i32_0 = arith.constant 0 : i32
    %c0_i32_1 = arith.constant 0 : i32
    return %arg0, %c0_i32, %c0_i32_0 : i32, i32, i32
  }
  func.func @transform_11(%arg0: i32) -> (i32, i32, i32) {
    %c0_i32 = arith.constant 0 : i32
    %c0_i32_0 = arith.constant 0 : i32
    %c0_i32_1 = arith.constant 0 : i32
    return %arg0, %c0_i32, %c0_i32_0 : i32, i32, i32
  }
}

</mosaic_0001>

<llo_original>
// kernel: deep_model_forward.1
$region0: #{deep_model_forward.1}
  #allocation0 [shape = 'u32[]', space=smem, size = 0x4, offset = 0x4, fixed_abs, tag = 'smem constant byte address 0x4 - core index']
  #allocation1 [shape = 'u32[144,128]{1,0:T(1,128)}', space=vmem, size = 0x12000, scoped, tag = 'internal scratch']
  %s0 = inlined_call_operand.vmem [shape: f32[2,24,42], index: 0, kind: input, shape index: {}]
  %s1 = inlined_call_operand.vmem [shape: f32[2,42,384], index: 1, kind: input, shape index: {}]
  %s2 = inlined_call_operand.vmem [shape: f32[2,1,384], index: 2, kind: input, shape index: {}]
  %s3 = inlined_call_operand.vmem [shape: f32[2,3,192,128], index: 3, kind: input, shape index: {}]
  %s4 = inlined_call_operand.vmem [shape: f32[2,1,128], index: 4, kind: input, shape index: {}]
  %s5 = inlined_call_operand.hbm [shape: f32[2,2,64,64], index: 5, kind: input, shape index: {}]
  %s6 = inlined_call_operand.vmem [shape: f32[2,1,64], index: 6, kind: input, shape index: {}]
  %s7 = inlined_call_operand.vmem [shape: f32[2,64,64], index: 7, kind: input, shape index: {}]
  %s8 = inlined_call_operand.vmem [shape: f32[2,1,64], index: 8, kind: input, shape index: {}]
  %s9 = inlined_call_operand.vmem [shape: f32[2,64,10], index: 9, kind: input, shape index: {}]
  %s10 = inlined_call_operand.vmem [shape: f32[2,1,10], index: 10, kind: input, shape index: {}]
  %s11 = inlined_call_operand.vmem [shape: f32[2,2,10], index: 11, kind: output, shape index: {}]
  %s12 = sld [smem:[#allocation0]]
  $region81: #{deep_model_forward.1} parent=0
    _
  %s14 = ssub.s32 1, %s12
  %s15 = scalar_select 0, %s14, %s12
  $region1: #{deep_model_forward.1} parent=0
    #allocation2 [shape = 'u8[131072]{0}', space=vmem, size = 0x20000, scoped, tag = 'input window, operand 5']
    #allocation3 [shape = 's32[2]{0}', space=sflag, size = 0x8, scoped, tag = 'scoped memory for deep_model_forward.1']
    %16 = vsyncpa [#allocation3], 0
    %s17 = scalar_lea.sflag [#allocation3], 1
    %18 = vsyncpa %s17, 0
    loop: start=0, step=1, limit=4
    $region2: #{deep_model_forward.1} parent=1 // loop_pre_header
      _
    $region3: #{deep_model_forward.1} parent=1 // loop_header
      %s20 = sphi 0, %s24
      %p21 = scmp.ge.s32.totalorder %s20, 4
      %s30 = sphi 0, %s32
      %s33 = sphi 0, %s30
      %s34 = sphi 0, %s33
      %s50 = sphi 0, %s34
      %s56 = sphi 0, %s58
      %s59 = sphi 0, %s56
      %s60 = sphi 0, %s59
      %s76 = sphi 0, %s60
      %s82 = sphi 0, %s84
      %s85 = sphi 0, %s82
      %s86 = sphi 0, %s85
      %s102 = sphi 0, %s86
      %s108 = sphi 0, %s110
      %s111 = sphi 0, %s108
      %s112 = sphi 0, %s111
      %s128 = sphi 0, %s112
      %s134 = sphi 0, %s136
      %s137 = sphi 0, %s134
      %s138 = sphi 0, %s137
      %s154 = sphi 0, %s138
      %s160 = sphi 0, %s162
      %s163 = sphi 0, %s160
      %s164 = sphi 0, %s163
      %s180 = sphi 0, %s164
      %s186 = sphi 0, %s188
      %s189 = sphi 0, %s186
      %s190 = sphi 0, %s189
      %s206 = sphi 0, %s190
      %s212 = sphi 0, %s214
      %s215 = sphi 0, %s212
      %s216 = sphi 0, %s215
      %s232 = sphi 0, %s216
      %s238 = sphi 0, %s240
      %s241 = sphi 0, %s238
      %s242 = sphi 0, %s241
      %s258 = sphi 0, %s242
      %s264 = sphi 0, %s266
      %s267 = sphi 0, %s264
      %s268 = sphi 0, %s267
      %s284 = sphi 0, %s268
      %s290 = sphi 0, %s292
      %s293 = sphi 0, %s290
      %s294 = sphi 0, %s293
      %s310 = sphi 0, %s294
      %s316 = sphi 0, %s318
      %s319 = sphi 0, %s316
      %s320 = sphi 0, %s319
      %s336 = sphi 0, %s320
    $region4: #{deep_model_forward.1} parent=1 // loop_header_branch
      %23 = sbr.rel (%p21) target = $region8
    $region5: #{deep_model_forward.1} parent=1 // loop_body
      %s25 = ssub.s32 %s20, 1
      %s26 = ssub.s32 %s20, 2
      %s27 = sadd.s32 %s20, 1
      %s28 = ssub.s32 %s20, %s27
      %p29 = scmp.eq.s32.totalorder %s28, 0
      %s31 = sadd.s32 %s30, 1
      %s32 = scalar_select %p29, %s30, %s31
      %p35 = pneg %p29
      %p36 = scmp.eq.s32.totalorder %s20, 1
      %p37 = por %p35, %p36
      %p38 = scmp.ne.s32.totalorder %s30, %s33
      %p39 = scmp.eq.s32.totalorder %s20, 0
      %p40 = por %p38, %p39
      %p41 = scmp.ne.s32.totalorder %s30, %s33
      %p42 = scmp.eq.s32.totalorder %s25, 1
      %p43 = por %p41, %p42
      %p44 = scmp.ne.s32.totalorder %s33, %s34
      %p45 = scmp.eq.s32.totalorder %s25, 0
      %p46 = por %p44, %p45
      %p47 = scmp.ne.s32.totalorder %s33, %s34
      %p48 = scmp.eq.s32.totalorder %s26, 1
      %p49 = por %p47, %p48
      %p51 = scmp.ne.s32.totalorder %s34, %s50
      %p52 = scmp.eq.s32.totalorder %s26, 0
      %p53 = por %p51, %p52
      %s54 = ssub.s32 %s20, %s27
      %p55 = scmp.eq.s32.totalorder %s54, 0
      %s57 = sadd.s32 %s56, 1
      %s58 = scalar_select %p55, %s56, %s57
      %p61 = pneg %p55
      %p62 = scmp.eq.s32.totalorder %s20, 1
      %p63 = por %p61, %p62
      %p64 = scmp.ne.s32.totalorder %s56, %s59
      %p65 = scmp.eq.s32.totalorder %s20, 0
      %p66 = por %p64, %p65
      %p67 = scmp.ne.s32.totalorder %s56, %s59
      %p68 = scmp.eq.s32.totalorder %s25, 1
      %p69 = por %p67, %p68
      %p70 = scmp.ne.s32.totalorder %s59, %s60
      %p71 = scmp.eq.s32.totalorder %s25, 0
      %p72 = por %p70, %p71
      %p73 = scmp.ne.s32.totalorder %s59, %s60
      %p74 = scmp.eq.s32.totalorder %s26, 1
      %p75 = por %p73, %p74
      %p77 = scmp.ne.s32.totalorder %s60, %s76
      %p78 = scmp.eq.s32.totalorder %s26, 0
      %p79 = por %p77, %p78
      %s80 = ssub.s32 %s20, %s27
      %p81 = scmp.eq.s32.totalorder %s80, 0
      %s83 = sadd.s32 %s82, 1
      %s84 = scalar_select %p81, %s82, %s83
      %p87 = pneg %p81
      %p88 = scmp.eq.s32.totalorder %s20, 1
      %p89 = por %p87, %p88
      %p90 = scmp.ne.s32.totalorder %s82, %s85
      %p91 = scmp.eq.s32.totalorder %s20, 0
      %p92 = por %p90, %p91
      %p93 = scmp.ne.s32.totalorder %s82, %s85
      %p94 = scmp.eq.s32.totalorder %s25, 1
      %p95 = por %p93, %p94
      %p96 = scmp.ne.s32.totalorder %s85, %s86
      %p97 = scmp.eq.s32.totalorder %s25, 0
      %p98 = por %p96, %p97
      %p99 = scmp.ne.s32.totalorder %s85, %s86
      %p100 = scmp.eq.s32.totalorder %s26, 1
      %p101 = por %p99, %p100
      %p103 = scmp.ne.s32.totalorder %s86, %s102
      %p104 = scmp.eq.s32.totalorder %s26, 0
      %p105 = por %p103, %p104
      %s106 = ssub.s32 %s20, %s27
      %p107 = scmp.eq.s32.totalorder %s106, 0
      %s109 = sadd.s32 %s108, 1
      %s110 = scalar_select %p107, %s108, %s109
      %p113 = pneg %p107
      %p114 = scmp.eq.s32.totalorder %s20, 1
      %p115 = por %p113, %p114
      %p116 = scmp.ne.s32.totalorder %s108, %s111
      %p117 = scmp.eq.s32.totalorder %s20, 0
      %p118 = por %p116, %p117
      %p119 = scmp.ne.s32.totalorder %s108, %s111
      %p120 = scmp.eq.s32.totalorder %s25, 1
      %p121 = por %p119, %p120
      %p122 = scmp.ne.s32.totalorder %s111, %s112
      %p123 = scmp.eq.s32.totalorder %s25, 0
      %p124 = por %p122, %p123
      %p125 = scmp.ne.s32.totalorder %s111, %s112
      %p126 = scmp.eq.s32.totalorder %s26, 1
      %p127 = por %p125, %p126
      %p129 = scmp.ne.s32.totalorder %s112, %s128
      %p130 = scmp.eq.s32.totalorder %s26, 0
      %p131 = por %p129, %p130
      %s132 = ssub.s32 %s20, %s27
      %p133 = scmp.eq.s32.totalorder %s132, 0
      %s135 = sadd.s32 %s134, 1
      %s136 = scalar_select %p133, %s134, %s135
      %p139 = pneg %p133
      %p140 = scmp.eq.s32.totalorder %s20, 1
      %p141 = por %p139, %p140
      %p142 = scmp.ne.s32.totalorder %s134, %s137
      %p143 = scmp.eq.s32.totalorder %s20, 0
      %p144 = por %p142, %p143
      %p145 = scmp.ne.s32.totalorder %s134, %s137
      %p146 = scmp.eq.s32.totalorder %s25, 1
      %p147 = por %p145, %p146
      %p148 = scmp.ne.s32.totalorder %s137, %s138
      %p149 = scmp.eq.s32.totalorder %s25, 0
      %p150 = por %p148, %p149
      %p151 = scmp.ne.s32.totalorder %s137, %s138
      %p152 = scmp.eq.s32.totalorder %s26, 1
      %p153 = por %p151, %p152
      %p155 = scmp.ne.s32.totalorder %s138, %s154
      %p156 = scmp.eq.s32.totalorder %s26, 0
      %p157 = por %p155, %p156
      %s158 = ssub.s32 %s20, %s27
      %p159 = scmp.eq.s32.totalorder %s158, 0
      %s161 = sadd.s32 %s160, 1
      %s162 = scalar_select %p159, %s160, %s161
      %p165 = pneg %p159
      %p166 = scmp.eq.s32.totalorder %s20, 1
      %p167 = por %p165, %p166
      %p168 = scmp.ne.s32.totalorder %s160, %s163
      %p169 = scmp.eq.s32.totalorder %s20, 0
      %p170 = por %p168, %p169
      %p171 = scmp.ne.s32.totalorder %s160, %s163
      %p172 = scmp.eq.s32.totalorder %s25, 1
      %p173 = por %p171, %p172
      %p174 = scmp.ne.s32.totalorder %s163, %s164
      %p175 = scmp.eq.s32.totalorder %s25, 0
      %p176 = por %p174, %p175
      %p177 = scmp.ne.s32.totalorder %s163, %s164
      %p178 = scmp.eq.s32.totalorder %s26, 1
      %p179 = por %p177, %p178
      %p181 = scmp.ne.s32.totalorder %s164, %s180
      %p182 = scmp.eq.s32.totalorder %s26, 0
      %p183 = por %p181, %p182
      %s184 = ssub.s32 %s20, %s27
      %p185 = scmp.eq.s32.totalorder %s184, 0
      %s187 = sadd.s32 %s186, 1
      %s188 = scalar_select %p185, %s186, %s187
      %p191 = pneg %p185
      %p192 = scmp.eq.s32.totalorder %s20, 1
      %p193 = por %p191, %p192
      %p194 = scmp.ne.s32.totalorder %s186, %s189
      %p195 = scmp.eq.s32.totalorder %s20, 0
      %p196 = por %p194, %p195
      %p197 = scmp.ne.s32.totalorder %s186, %s189
      %p198 = scmp.eq.s32.totalorder %s25, 1
      %p199 = por %p197, %p198
      %p200 = scmp.ne.s32.totalorder %s189, %s190
      %p201 = scmp.eq.s32.totalorder %s25, 0
      %p202 = por %p200, %p201
      %p203 = scmp.ne.s32.totalorder %s189, %s190
      %p204 = scmp.eq.s32.totalorder %s26, 1
      %p205 = por %p203, %p204
      %p207 = scmp.ne.s32.totalorder %s190, %s206
      %p208 = scmp.eq.s32.totalorder %s26, 0
      %p209 = por %p207, %p208
      %s210 = ssub.s32 %s20, %s27
      %p211 = scmp.eq.s32.totalorder %s210, 0
      %s213 = sadd.s32 %s212, 1
      %s214 = scalar_select %p211, %s212, %s213
      %p217 = pneg %p211
      %p218 = scmp.eq.s32.totalorder %s20, 1
      %p219 = por %p217, %p218
      %p220 = scmp.ne.s32.totalorder %s212, %s215
      %p221 = scmp.eq.s32.totalorder %s20, 0
      %p222 = por %p220, %p221
      %p223 = scmp.ne.s32.totalorder %s212, %s215
      %p224 = scmp.eq.s32.totalorder %s25, 1
      %p225 = por %p223, %p224
      %p226 = scmp.ne.s32.totalorder %s215, %s216
      %p227 = scmp.eq.s32.totalorder %s25, 0
      %p228 = por %p226, %p227
      %p229 = scmp.ne.s32.totalorder %s215, %s216
      %p230 = scmp.eq.s32.totalorder %s26, 1
      %p231 = por %p229, %p230
      %p233 = scmp.ne.s32.totalorder %s216, %s232
      %p234 = scmp.eq.s32.totalorder %s26, 0
      %p235 = por %p233, %p234
      %s236 = ssub.s32 %s20, %s27
      %p237 = scmp.eq.s32.totalorder %s236, 0
      %s239 = sadd.s32 %s238, 1
      %s240 = scalar_select %p237, %s238, %s239
      %p243 = pneg %p237
      %p244 = scmp.eq.s32.totalorder %s20, 1
      %p245 = por %p243, %p244
      %p246 = scmp.ne.s32.totalorder %s238, %s241
      %p247 = scmp.eq.s32.totalorder %s20, 0
      %p248 = por %p246, %p247
      %p249 = scmp.ne.s32.totalorder %s238, %s241
      %p250 = scmp.eq.s32.totalorder %s25, 1
      %p251 = por %p249, %p250
      %p252 = scmp.ne.s32.totalorder %s241, %s242
      %p253 = scmp.eq.s32.totalorder %s25, 0
      %p254 = por %p252, %p253
      %p255 = scmp.ne.s32.totalorder %s241, %s242
      %p256 = scmp.eq.s32.totalorder %s26, 1
      %p257 = por %p255, %p256
      %p259 = scmp.ne.s32.totalorder %s242, %s258
      %p260 = scmp.eq.s32.totalorder %s26, 0
      %p261 = por %p259, %p260
      %s262 = ssub.s32 %s20, %s27
      %p263 = scmp.eq.s32.totalorder %s262, 0
      %s265 = sadd.s32 %s264, 1
      %s266 = scalar_select %p263, %s264, %s265
      %p269 = pneg %p263
      %p270 = scmp.eq.s32.totalorder %s20, 1
      %p271 = por %p269, %p270
      %p272 = scmp.ne.s32.totalorder %s264, %s267
      %p273 = scmp.eq.s32.totalorder %s20, 0
      %p274 = por %p272, %p273
      %p275 = scmp.ne.s32.totalorder %s264, %s267
      %p276 = scmp.eq.s32.totalorder %s25, 1
      %p277 = por %p275, %p276
      %p278 = scmp.ne.s32.totalorder %s267, %s268
      %p279 = scmp.eq.s32.totalorder %s25, 0
      %p280 = por %p278, %p279
      %p281 = scmp.ne.s32.totalorder %s267, %s268
      %p282 = scmp.eq.s32.totalorder %s26, 1
      %p283 = por %p281, %p282
      %p285 = scmp.ne.s32.totalorder %s268, %s284
      %p286 = scmp.eq.s32.totalorder %s26, 0
      %p287 = por %p285, %p286
      %s288 = ssub.s32 %s20, %s27
      %p289 = scmp.eq.s32.totalorder %s288, 0
      %s291 = sadd.s32 %s290, 1
      %s292 = scalar_select %p289, %s290, %s291
      %p295 = pneg %p289
      %p296 = scmp.eq.s32.totalorder %s20, 1
      %p297 = por %p295, %p296
      %p298 = scmp.ne.s32.totalorder %s290, %s293
      %p299 = scmp.eq.s32.totalorder %s20, 0
      %p300 = por %p298, %p299
      %p301 = scmp.ne.s32.totalorder %s290, %s293
      %p302 = scmp.eq.s32.totalorder %s25, 1
      %p303 = por %p301, %p302
      %p304 = scmp.ne.s32.totalorder %s293, %s294
      %p305 = scmp.eq.s32.totalorder %s25, 0
      %p306 = por %p304, %p305
      %p307 = scmp.ne.s32.totalorder %s293, %s294
      %p308 = scmp.eq.s32.totalorder %s26, 1
      %p309 = por %p307, %p308
      %p311 = scmp.ne.s32.totalorder %s294, %s310
      %p312 = scmp.eq.s32.totalorder %s26, 0
      %p313 = por %p311, %p312
      %s314 = ssub.s32 %s20, %s27
      %p315 = scmp.eq.s32.totalorder %s314, 0
      %s317 = sadd.s32 %s316, 1
      %s318 = scalar_select %p315, %s316, %s317
      %p321 = pneg %p315
      %p322 = scmp.eq.s32.totalorder %s20, 1
      %p323 = por %p321, %p322
      %p324 = scmp.ne.s32.totalorder %s316, %s319
      %p325 = scmp.eq.s32.totalorder %s20, 0
      %p326 = por %p324, %p325
      %p327 = scmp.ne.s32.totalorder %s316, %s319
      %p328 = scmp.eq.s32.totalorder %s25, 1
      %p329 = por %p327, %p328
      %p330 = scmp.ne.s32.totalorder %s319, %s320
      %p331 = scmp.eq.s32.totalorder %s25, 0
      %p332 = por %p330, %p331
      %p333 = scmp.ne.s32.totalorder %s319, %s320
      %p334 = scmp.eq.s32.totalorder %s26, 1
      %p335 = por %p333, %p334
      %p337 = scmp.ne.s32.totalorder %s320, %s336
      %p338 = scmp.eq.s32.totalorder %s26, 0
      %p339 = por %p337, %p338
      %p340 = scmp.le.s32.totalorder 1, %s20
      %p341 = scmp.lt.s32.totalorder %s20, 3
      %p342 = pnand %p340, %p341
      %p343 = pneg %p342
      // Predicated region
      $region9: #{deep_model_forward.1} parent=5 // pred_check
        _
      $region10: #{deep_model_forward.1} parent=5 // pred_check_branch
        %345 = sbr.rel (%p342) target = $region12
      $region11: #{deep_model_forward.1} parent=5 // pred_region
        %s346 = ssub.s32 %s20, 1
      $region12: #{deep_model_forward.1} parent=5 // pred_fallthru
        _
      %p347 = scmp.lt.s32.totalorder %s20, 2
      // Predicated region
      $region13: #{deep_model_forward.1} parent=5 // pred_check
        %p348 = pneg %p347
      $region14: #{deep_model_forward.1} parent=5 // pred_check_branch
        %350 = sbr.rel (%p348) target = $region16
      $region15: #{deep_model_forward.1} parent=5 // pred_region
        // Predicated region
        $region17: #{deep_model_forward.1} parent=15 // pred_check
          %p351 = pneg %p40
        $region18: #{deep_model_forward.1} parent=15 // pred_check_branch
          %353 = sbr.rel (%p351) target = $region20
        $region19: #{deep_model_forward.1} parent=15 // pred_region
          %p354 = scmp.lt.s32.totalorder %s20, 1
          %s355 = scalar_select %p354, %s20, 1
          %s356 = smul.addr %s355, 3
          %s357 = smul.addr %s356, 8
          %s358 = scalar_lea.vmem %s0, %s357
        $region20: #{deep_model_forward.1} parent=15 // pred_fallthru
          _
        // Predicated region
        $region21: #{deep_model_forward.1} parent=15 // pred_check
          %p359 = pneg %p66
        $region22: #{deep_model_forward.1} parent=15 // pred_check_branch
          %361 = sbr.rel (%p359) target = $region24
        $region23: #{deep_model_forward.1} parent=15 // pred_region
          %p362 = scmp.lt.s32.totalorder %s20, 1
          %s363 = scalar_select %p362, %s20, 1
          %s364 = smul.addr %s363, 18
          %s365 = smul.addr %s364, 8
          %s366 = scalar_lea.vmem %s1, %s365
        $region24: #{deep_model_forward.1} parent=15 // pred_fallthru
          _
        // Predicated region
        $region25: #{deep_model_forward.1} parent=15 // pred_check
          %p367 = pneg %p92
        $region26: #{deep_model_forward.1} parent=15 // pred_check_branch
          %369 = sbr.rel (%p367) target = $region28
        $region27: #{deep_model_forward.1} parent=15 // pred_region
          %p370 = scmp.lt.s32.totalorder %s20, 1
          %s371 = scalar_select %p370, %s20, 1
          %s372 = smul.addr %s371, 3
          %s373 = scalar_lea.vmem %s2, %s372
        $region28: #{deep_model_forward.1} parent=15 // pred_fallthru
          _
        // Predicated region
        $region29: #{deep_model_forward.1} parent=15 // pred_check
          %p374 = pneg %p118
        $region30: #{deep_model_forward.1} parent=15 // pred_check_branch
          %376 = sbr.rel (%p374) target = $region32
        $region31: #{deep_model_forward.1} parent=15 // pred_region
          %p377 = scmp.lt.s32.totalorder %s20, 1
          %s378 = scalar_select %p377, %s20, 1
          %s379 = smul.addr %s378, 72
          %s380 = smul.addr %s379, 8
          %s381 = scalar_lea.vmem %s3, %s380
        $region32: #{deep_model_forward.1} parent=15 // pred_fallthru
          _
        // Predicated region
        $region33: #{deep_model_forward.1} parent=15 // pred_check
          %p382 = pneg %p144
        $region34: #{deep_model_forward.1} parent=15 // pred_check_branch
          %384 = sbr.rel (%p382) target = $region36
        $region35: #{deep_model_forward.1} parent=15 // pred_region
          %p385 = scmp.lt.s32.totalorder %s20, 1
          %s386 = scalar_select %p385, %s20, 1
          %s387 = scalar_lea.vmem %s4, %s386
        $region36: #{deep_model_forward.1} parent=15 // pred_fallthru
          _
        // Predicated region
        $region37: #{deep_model_forward.1} parent=15 // pred_check
          %p388 = pneg %p170
        $region38: #{deep_model_forward.1} parent=15 // pred_check_branch
          %390 = sbr.rel (%p388) target = $region40
        $region39: #{deep_model_forward.1} parent=15 // pred_region
          %s391 = sand.u32 %s160, 1
          %s392 = scalar_lea.sflag [#allocation3], %s391
          %s393 = sand.u32 %s160, 1
          %s394 = smul.addr %s393, 128
          %s395 = scalar_lea.vmem [#allocation2], %s394
          %s397 = ssub.s32 2048, 2048
          %398 = vsyncadd %s392, %s397
          %s399 = smul.addr %s20, 16
          %s400 = smul.addr %s399, 128
          %s401 = scalar_lea.hbm %s5, %s400
          %s402 = sshll.u32 %s395, 4
          %s403 = int_to_ptr.vmem [resolvable:$true] %s402
          %408 = dma.hbm_to_vmem [thread:$0]  %s401, 2048, %s403, %s392, 128, 128, 8
        $region40: #{deep_model_forward.1} parent=15 // pred_fallthru
          _
        // Predicated region
        $region41: #{deep_model_forward.1} parent=15 // pred_check
          %p409 = pneg %p196
        $region42: #{deep_model_forward.1} parent=15 // pred_check_branch
          %411 = sbr.rel (%p409) target = $region44
        $region43: #{deep_model_forward.1} parent=15 // pred_region
          %p412 = scmp.lt.s32.totalorder %s20, 1
          %s413 = scalar_select %p412, %s20, 1
          %s414 = scalar_lea.vmem %s6, %s413
        $region44: #{deep_model_forward.1} parent=15 // pred_fallthru
          _
        // Predicated region
        $region45: #{deep_model_forward.1} parent=15 // pred_check
          %p415 = pneg %p222
        $region46: #{deep_model_forward.1} parent=15 // pred_check_branch
          %417 = sbr.rel (%p415) target = $region48
        $region47: #{deep_model_forward.1} parent=15 // pred_region
          %p418 = scmp.lt.s32.totalorder %s20, 1
          %s419 = scalar_select %p418, %s20, 1
          %s420 = smul.addr %s419, 8
          %s421 = smul.addr %s420, 8
          %s422 = scalar_lea.vmem %s7, %s421
        $region48: #{deep_model_forward.1} parent=15 // pred_fallthru
          _
        // Predicated region
        $region49: #{deep_model_forward.1} parent=15 // pred_check
          %p423 = pneg %p248
        $region50: #{deep_model_forward.1} parent=15 // pred_check_branch
          %425 = sbr.rel (%p423) target = $region52
        $region51: #{deep_model_forward.1} parent=15 // pred_region
          %p426 = scmp.lt.s32.totalorder %s20, 1
          %s427 = scalar_select %p426, %s20, 1
          %s428 = scalar_lea.vmem %s8, %s427
        $region52: #{deep_model_forward.1} parent=15 // pred_fallthru
          _
        // Predicated region
        $region53: #{deep_model_forward.1} parent=15 // pred_check
          %p429 = pneg %p274
        $region54: #{deep_model_forward.1} parent=15 // pred_check_branch
          %431 = sbr.rel (%p429) target = $region56
        $region55: #{deep_model_forward.1} parent=15 // pred_region
          %p432 = scmp.lt.s32.totalorder %s20, 1
          %s433 = scalar_select %p432, %s20, 1
          %s434 = smul.addr %s433, 8
          %s435 = smul.addr %s434, 8
          %s436 = scalar_lea.vmem %s9, %s435
        $region56: #{deep_model_forward.1} parent=15 // pred_fallthru
          _
        // Predicated region
        $region57: #{deep_model_forward.1} parent=15 // pred_check
          %p437 = pneg %p300
        $region58: #{deep_model_forward.1} parent=15 // pred_check_branch
          %439 = sbr.rel (%p437) target = $region60
        $region59: #{deep_model_forward.1} parent=15 // pred_region
          %p440 = scmp.lt.s32.totalorder %s20, 1
          %s441 = scalar_select %p440, %s20, 1
          %s442 = scalar_lea.vmem %s10, %s441
        $region60: #{deep_model_forward.1} parent=15 // pred_fallthru
          _
      $region16: #{deep_model_forward.1} parent=5 // pred_fallthru
        _
      %p443 = scmp.le.s32.totalorder 1, %s20
      %p444 = scmp.lt.s32.totalorder %s20, 3
      %p445 = pnand %p443, %p444
      %p446 = pneg %p445
      // Predicated region
      $region61: #{deep_model_forward.1} parent=5 // pred_check
        _
      $region62: #{deep_model_forward.1} parent=5 // pred_check_branch
        %448 = sbr.rel (%p445) target = $region64
      $region63: #{deep_model_forward.1} parent=5 // pred_region
        %s449 = ssub.s32 %s20, 1
        %s450 = sand.u32 %s163, 1
        %s451 = scalar_lea.sflag [#allocation3], %s450
        %s452 = sand.u32 %s163, 1
        %s453 = smul.addr %s452, 128
        %s454 = scalar_lea.vmem [#allocation2], %s453
        // Predicated region
        $region65: #{deep_model_forward.1} parent=63 // pred_check
          %p455 = pneg %p176
        $region66: #{deep_model_forward.1} parent=63 // pred_check_branch
          %457 = sbr.rel (%p455) target = $region68
        $region67: #{deep_model_forward.1} parent=63 // pred_region
          %458 = dma.done %s451, 2048
        $region68: #{deep_model_forward.1} parent=63 // pred_fallthru
          _
        %p459 = scmp.lt.s32.totalorder %s25, 1
        %s460 = scalar_select %p459, %s25, 1
        %s461 = smul.addr %s460, 3
        %s462 = smul.addr %s461, 8
        %s463 = scalar_lea.vmem %s0, %s462
        %p464 = pneg %p46
        %p465 = pneg %p43
        %p466 = scmp.lt.s32.totalorder %s25, 1
        %s467 = scalar_select %p466, %s25, 1
        %s468 = smul.addr %s467, 18
        %s469 = smul.addr %s468, 8
        %s470 = scalar_lea.vmem %s1, %s469
        %p471 = pneg %p72
        %p472 = pneg %p69
        %p473 = scmp.lt.s32.totalorder %s25, 1
        %s474 = scalar_select %p473, %s25, 1
        %s475 = smul.addr %s474, 3
        %s476 = scalar_lea.vmem %s2, %s475
        %p477 = pneg %p98
        %p478 = pneg %p95
        %p479 = scmp.lt.s32.totalorder %s25, 1
        %s480 = scalar_select %p479, %s25, 1
        %s481 = smul.addr %s480, 72
        %s482 = smul.addr %s481, 8
        %s483 = scalar_lea.vmem %s3, %s482
        %p484 = pneg %p124
        %p485 = pneg %p121
        %p486 = scmp.lt.s32.totalorder %s25, 1
        %s487 = scalar_select %p486, %s25, 1
        %s488 = scalar_lea.vmem %s4, %s487
        %p489 = pneg %p150
        %p490 = pneg %p147
        %s491 = sand.u32 %s163, 1
        %s492 = scalar_lea.sflag [#allocation3], %s491
        %s493 = sand.u32 %s163, 1
        %s494 = smul.addr %s493, 128
        %s495 = scalar_lea.vmem [#allocation2], %s494
        %p496 = pneg %p176
        %p497 = pneg %p173
        %p498 = scmp.lt.s32.totalorder %s25, 1
        %s499 = scalar_select %p498, %s25, 1
        %s500 = scalar_lea.vmem %s6, %s499
        %p501 = pneg %p202
        %p502 = pneg %p199
        %p503 = scmp.lt.s32.totalorder %s25, 1
        %s504 = scalar_select %p503, %s25, 1
        %s505 = smul.addr %s504, 8
        %s506 = smul.addr %s505, 8
        %s507 = scalar_lea.vmem %s7, %s506
        %p508 = pneg %p228
        %p509 = pneg %p225
        %p510 = scmp.lt.s32.totalorder %s25, 1
        %s511 = scalar_select %p510, %s25, 1
        %s512 = scalar_lea.vmem %s8, %s511
        %p513 = pneg %p254
        %p514 = pneg %p251
        %p515 = scmp.lt.s32.totalorder %s25, 1
        %s516 = scalar_select %p515, %s25, 1
        %s517 = smul.addr %s516, 8
        %s518 = smul.addr %s517, 8
        %s519 = scalar_lea.vmem %s9, %s518
        %p520 = pneg %p280
        %p521 = pneg %p277
        %p522 = scmp.lt.s32.totalorder %s25, 1
        %s523 = scalar_select %p522, %s25, 1
        %s524 = scalar_lea.vmem %s10, %s523
        %p525 = pneg %p306
        %p526 = pneg %p303
        %p527 = pneg %p332
        %p528 = pneg %p329
        %p529 = scmp.lt.s32.totalorder %s25, 1
        %s530 = scalar_select %p529, %s25, 1
        %s531 = smul.addr %s530, 2
        %s532 = scalar_lea.vmem %s11, %s531
        %p533 = scmp.lt.s32.totalorder %s25, 1
        %s534 = scalar_select %p533, %s25, 1
        %s535 = smul.addr %s534, 3
        %s536 = smul.addr %s535, 8
        %s537 = scalar_lea.vmem %s0, %s536
        %p538 = scmp.lt.s32.totalorder %s25, 1
        %s539 = scalar_select %p538, %s25, 1
        %s540 = smul.addr %s539, 18
        %s541 = smul.addr %s540, 8
        %s542 = scalar_lea.vmem %s1, %s541
        %p543 = scmp.lt.s32.totalorder %s25, 1
        %s544 = scalar_select %p543, %s25, 1
        %s545 = smul.addr %s544, 3
        %s546 = scalar_lea.vmem %s2, %s545
        %p547 = scmp.lt.s32.totalorder %s25, 1
        %s548 = scalar_select %p547, %s25, 1
        %s549 = smul.addr %s548, 72
        %s550 = smul.addr %s549, 8
        %s551 = scalar_lea.vmem %s3, %s550
        %p552 = scmp.lt.s32.totalorder %s25, 1
        %s553 = scalar_select %p552, %s25, 1
        %s554 = scalar_lea.vmem %s4, %s553
        %p555 = scmp.lt.s32.totalorder %s25, 1
        %s556 = scalar_select %p555, %s25, 1
        %s557 = scalar_lea.vmem %s6, %s556
        %p558 = scmp.lt.s32.totalorder %s25, 1
        %s559 = scalar_select %p558, %s25, 1
        %s560 = smul.addr %s559, 8
        %s561 = smul.addr %s560, 8
        %s562 = scalar_lea.vmem %s7, %s561
        %p563 = scmp.lt.s32.totalorder %s25, 1
        %s564 = scalar_select %p563, %s25, 1
        %s565 = scalar_lea.vmem %s8, %s564
        %p566 = scmp.lt.s32.totalorder %s25, 1
        %s567 = scalar_select %p566, %s25, 1
        %s568 = smul.addr %s567, 8
        %s569 = smul.addr %s568, 8
        %s570 = scalar_lea.vmem %s9, %s569
        %p571 = scmp.lt.s32.totalorder %s25, 1
        %s572 = scalar_select %p571, %s25, 1
        %s573 = scalar_lea.vmem %s10, %s572
        %p574 = scmp.lt.s32.totalorder %s25, 1
        %s575 = scalar_select %p574, %s25, 1
        %s576 = smul.addr %s575, 2
        %s577 = scalar_lea.vmem %s11, %s576
        %v578 = vld [vmem:[%s537] sm:$0xff]
        %v579 = vld [vmem:[%s537 + $0x8] sm:$0xff]
        %v580 = vld [vmem:[%s537 + $0x10] sm:$0xff]
        %v581 = vld [vmem:[%s542] sm:$0xff]
        %v582 = vld [vmem:[%s542 + $0x8] sm:$0xff]
        %v583 = vld [vmem:[%s542 + $0x10] sm:$0xff]
        %v584 = vld [vmem:[%s542 + $0x18] sm:$0xff]
        %v585 = vld [vmem:[%s542 + $0x20] sm:$0xff]
        %v586 = vld [vmem:[%s542 + $0x28] sm:$0xff]
        %v587 = vld [vmem:[%s542 + $0x30] sm:$0xff]
        %v588 = vld [vmem:[%s542 + $0x38] sm:$0xff]
        %v589 = vld [vmem:[%s542 + $0x40] sm:$0xff]
        %v590 = vld [vmem:[%s542 + $0x48] sm:$0xff]
        %v591 = vld [vmem:[%s542 + $0x50] sm:$0xff]
        %v592 = vld [vmem:[%s542 + $0x58] sm:$0xff]
        %v593 = vld [vmem:[%s542 + $0x60] sm:$0xff]
        %v594 = vld [vmem:[%s542 + $0x68] sm:$0xff]
        %v595 = vld [vmem:[%s542 + $0x70] sm:$0xff]
        %v596 = vld [vmem:[%s542 + $0x78] sm:$0x3]
        %v597 = vld [vmem:[%s542 + $0x80] sm:$0x3]
        %v598 = vld [vmem:[%s542 + $0x88] sm:$0x3]
        %v599 = vld [vmem:[%s546] sm:$0x7]
        %v601 = vlaneseq
        %v602 = vshrl.u32 %v601, 7
        %v603 = vsub.s32 0, %v602
        %v604 = vrot.slane %v599, %v603
        %v605 = vlaneseq
        %v606 = vshrl.u32 %v605, 7
        %v607 = vsub.s32 1, %v606
        %v608 = vrot.slane %v599, %v607
        %v609 = vlaneseq
        %v610 = vshrl.u32 %v609, 7
        %v611 = vsub.s32 2, %v610
        %v612 = vrot.slane %v599, %v611
        %vm616 = vcmask 343040
        %v618 = vsel %vm616, %v578, 0
        %v621 = vsel %vm616, %v579, 0
        %v624 = vsel %vm616, %v580, 0
        %vm626 = vcmask 1041408
        %v628 = vsel %vm626, %v596, 0
        %v631 = vsel %vm626, %v597, 0
        %v634 = vsel %vm626, %v598, 0
        %636 = vmatprep.subr.mxu0 %v582
        %637 = vmatpush1.msra.mxu0 %v581
        %638 = vmatprep.subr.mxu0 %v585
        %639 = vmatpush1.msra.mxu0 %v584
        %640 = vmatprep.subr.mxu0 %v588
        %641 = vmatpush1.msra.mxu0 %v587
        %642 = vmatprep.subr.mxu0 %v591
        %643 = vmatpush1.msra.mxu0 %v590
        %644 = vmatprep.subr.mxu0 %v594
        %645 = vmatpush1.msra.mxu0 %v593
        %646 = vmatprep.subr.mxu0 %v631
        %647 = vmatpush1.msra.mxu0 %v628
        %648 = vmatprep.subr.mxu0 0.0
        %649 = vmatpush1.msra.mxu0 0.0
        %650 = vmatprep.subr.mxu0 0.0
        %651 = vmatpush1.msra.mxu0 0.0
        %652 = vmatprep.subr.mxu0 0.0
        %653 = vmatpush1.msra.mxu0 0.0
        %654 = vmatprep.subr.mxu0 0.0
        %655 = vmatpush1.msra.mxu0 0.0
        %656 = vmatprep.subr.mxu0 0.0
        %657 = vmatpush1.msra.mxu0 0.0
        %658 = vmatprep.subr.mxu0 0.0
        %659 = vmatpush1.msra.mxu0 0.0
        %660 = vmatprep.subr.mxu0 0.0
        %661 = vmatpush1.msra.mxu0 0.0
        %662 = vmatprep.subr.mxu0 0.0
        %663 = vmatpush1.msra.mxu0 0.0
        %664 = vmatprep.subr.mxu0 0.0
        %665 = vmatpush1.msra.mxu0 0.0
        %666 = vmatprep.subr.mxu0 0.0
        %667 = vmatpush1.msra.mxu0 0.0
        %668 = vmatprep.subr.mxu0 0.0
        %669 = vmatpush1.msra.mxu0 0.0
        %670 = vmatprep.subr.mxu0 0.0
        %671 = vmatpush1.msra.mxu0 0.0
        %672 = vmatprep.subr.mxu0 0.0
        %673 = vmatpush1.msra.mxu0 0.0
        %674 = vmatprep.subr.mxu0 0.0
        %675 = vmatpush1.msra.mxu0 0.0
        %676 = vmatprep.subr.mxu0 0.0
        %677 = vmatpush1.msra.mxu0 0.0
        %678 = vmatprep.subr.mxu0 0.0
        %679 = vmatpush1.msra.mxu0 0.0
        %680 = vmatprep.subr.mxu0 0.0
        %681 = vmatpush1.msra.mxu0 0.0
        %682 = vmatprep.subr.mxu0 0.0
        %683 = vmatpush1.msra.mxu0 0.0
        %684 = vmatprep.subr.mxu0 0.0
        %685 = vmatpush1.msra.mxu0 0.0
        %686 = vmatprep.subr.mxu0 0.0
        %687 = vmatpush1.msra.mxu0 0.0
        %688 = vmatprep.subr.mxu0 0.0
        %689 = vmatpush1.msra.mxu0 0.0
        %690 = vmatprep.subr.mxu0 0.0
        %691 = vmatpush1.msra.mxu0 0.0
        %692 = vmatprep.subr.mxu0 0.0
        %693 = vmatpush1.msra.mxu0 0.0
        %694 = vmatprep.subr.mxu0 0.0
        %695 = vmatpush1.msra.mxu0 0.0
        %696 = vmatprep.subr.mxu0 0.0
        %697 = vmatpush1.msra.mxu0 0.0
        %698 = vmatprep.subr.mxu0 0.0
        %699 = vmatpush1.msra.mxu0 0.0
        %700 = vmatprep.mubr.f32.mxu0 0.0
        %701 = vmatmul.mubr.f32.gmra.mrb[0].mxu0 %v618
        %v702 = vpop.f32.mrb[0].mxu0
        %v703 = vadd.f32 %v604, %v702
        %v704 = vpop.f32.mrb[0].mxu0
        %v705 = vadd.f32 %v608, %v704
        %706 = vmatprep.mubr.f32.mxu0 0.0
        %707 = vmatmul.mubr.f32.gmra.mrb[0].mxu0 %v621
        %v708 = vpop.f32.mrb[0].mxu0
        %v709 = vadd.f32 %v604, %v708
        %v710 = vpop.f32.mrb[0].mxu0
        %v711 = vadd.f32 %v608, %v710
        %712 = vmatprep.mubr.f32.mxu0 0.0
        %713 = vmatmul.mubr.f32.gmra.mrb[0].mxu0 %v624
        %v714 = vpop.f32.mrb[0].mxu0
        %v715 = vadd.f32 %v604, %v714
        %v716 = vpop.f32.mrb[0].mxu0
        %v717 = vadd.f32 %v608, %v716
        %718 = vdwg.mxu0
        %719 = vmatprep.subr.mxu0 0.0
        %720 = vmatpush1.msra.mxu0 %v583
        %721 = vmatprep.subr.mxu0 0.0
        %722 = vmatpush1.msra.mxu0 %v586
        %723 = vmatprep.subr.mxu0 0.0
        %724 = vmatpush1.msra.mxu0 %v589
        %725 = vmatprep.subr.mxu0 0.0
        %726 = vmatpush1.msra.mxu0 %v592
        %727 = vmatprep.subr.mxu0 0.0
        %728 = vmatpush1.msra.mxu0 %v595
        %729 = vmatprep.subr.mxu0 0.0
        %730 = vmatpush1.msra.mxu0 %v634
        %731 = vmatprep.subr.mxu0 0.0
        %732 = vmatpush1.msra.mxu0 0.0
        %733 = vmatprep.subr.mxu0 0.0
        %734 = vmatpush1.msra.mxu0 0.0
        %735 = vmatprep.subr.mxu0 0.0
        %736 = vmatpush1.msra.mxu0 0.0
        %737 = vmatprep.subr.mxu0 0.0
        %738 = vmatpush1.msra.mxu0 0.0
        %739 = vmatprep.subr.mxu0 0.0
        %740 = vmatpush1.msra.mxu0 0.0
        %741 = vmatprep.subr.mxu0 0.0
        %742 = vmatpush1.msra.mxu0 0.0
        %743 = vmatprep.subr.mxu0 0.0
        %744 = vmatpush1.msra.mxu0 0.0
        %745 = vmatprep.subr.mxu0 0.0
        %746 = vmatpush1.msra.mxu0 0.0
        %747 = vmatprep.subr.mxu0 0.0
        %748 = vmatpush1.msra.mxu0 0.0
        %749 = vmatprep.subr.mxu0 0.0
        %750 = vmatpush1.msra.mxu0 0.0
        %751 = vmatprep.subr.mxu0 0.0
        %752 = vmatpush1.msra.mxu0 0.0
        %753 = vmatprep.subr.mxu0 0.0
        %754 = vmatpush1.msra.mxu0 0.0
        %755 = vmatprep.subr.mxu0 0.0
        %756 = vmatpush1.msra.mxu0 0.0
        %757 = vmatprep.subr.mxu0 0.0
        %758 = vmatpush1.msra.mxu0 0.0
        %759 = vmatprep.subr.mxu0 0.0
        %760 = vmatpush1.msra.mxu0 0.0
        %761 = vmatprep.subr.mxu0 0.0
        %762 = vmatpush1.msra.mxu0 0.0
        %763 = vmatprep.subr.mxu0 0.0
        %764 = vmatpush1.msra.mxu0 0.0
        %765 = vmatprep.subr.mxu0 0.0
        %766 = vmatpush1.msra.mxu0 0.0
        %767 = vmatprep.subr.mxu0 0.0
        %768 = vmatpush1.msra.mxu0 0.0
        %769 = vmatprep.subr.mxu0 0.0
        %770 = vmatpush1.msra.mxu0 0.0
        %771 = vmatprep.subr.mxu0 0.0
        %772 = vmatpush1.msra.mxu0 0.0
        %773 = vmatprep.subr.mxu0 0.0
        %774 = vmatpush1.msra.mxu0 0.0
        %775 = vmatprep.subr.mxu0 0.0
        %776 = vmatpush1.msra.mxu0 0.0
        %777 = vmatprep.subr.mxu0 0.0
        %778 = vmatpush1.msra.mxu0 0.0
        %779 = vmatprep.subr.mxu0 0.0
        %780 = vmatpush1.msra.mxu0 0.0
        %781 = vmatprep.subr.mxu0 0.0
        %782 = vmatpush1.msra.mxu0 0.0
        %783 = vmatprep.mubr.f32.mxu0 0.0
        %784 = vmatmul.mubr.f32.gmra.mrb[0].mxu0 %v618
        %v785 = vpop.f32.mrb[0].mxu0
        %v786 = vadd.f32 %v612, %v785
        %v787 = vpop.f32.mrb[0].mxu0
        %788 = vmatprep.mubr.f32.mxu0 0.0
        %789 = vmatmul.mubr.f32.gmra.mrb[0].mxu0 %v621
        %v790 = vpop.f32.mrb[0].mxu0
        %v791 = vadd.f32 %v612, %v790
        %v792 = vpop.f32.mrb[0].mxu0
        %793 = vmatprep.mubr.f32.mxu0 0.0
        %794 = vmatmul.mubr.f32.gmra.mrb[0].mxu0 %v624
        %v795 = vpop.f32.mrb[0].mxu0
        %v796 = vadd.f32 %v612, %v795
        %v797 = vpop.f32.mrb[0].mxu0
        %798 = vdwg.mxu0
        %805 = vrot.lane.b32.xlu0 %v705, 64
        %v806 = vpop.permute.xlu0 %805
        %807 = vrot.lane.b32.xlu0 %v786, 64
        %v808 = vpop.permute.xlu0 %807
        %809 = vrot.lane.b32.xlu0 %v711, 64
        %v810 = vpop.permute.xlu0 %809
        %811 = vrot.lane.b32.xlu0 %v791, 64
        %v812 = vpop.permute.xlu0 %811
        %813 = vrot.lane.b32.xlu0 %v717, 64
        %v814 = vpop.permute.xlu0 %813
        %815 = vrot.lane.b32.xlu0 %v796, 64
        %v816 = vpop.permute.xlu0 %815
        %vm817 = vcmask 523264
        %v818 = vsel %vm817, %v806, %v808
        %v819 = vsel %vm817, %v810, %v812
        %v820 = vsel %vm817, %v814, %v816
        %v827 = vmax.f32 %v703, %v818
        %v828 = vmax.f32 %v705, %v808
        %v829 = vmax.f32 %v709, %v819
        %v830 = vmax.f32 %v711, %v812
        %v831 = vmax.f32 %v715, %v820
        %v832 = vmax.f32 %v717, %v816
        %v839 = vcombine.low %v827, %v828
        %v840 = vcombine.high %v827, %v828
        %v841 = vcombine.low %v829, %v830
        %v842 = vcombine.high %v829, %v830
        %v843 = vcombine.low %v831, %v832
        %v844 = vcombine.high %v831, %v832
        %v851 = vrot.slane %v839, 6
        %v852 = vrot.slane %v851, 4
        %v853 = vrot.slane %v840, 6
        %v854 = vrot.slane %v853, 4
        %v855 = vrot.slane %v841, 6
        %v856 = vrot.slane %v855, 4
        %v857 = vrot.slane %v842, 6
        %v858 = vrot.slane %v857, 4
        %v859 = vrot.slane %v843, 6
        %v860 = vrot.slane %v859, 4
        %v861 = vrot.slane %v844, 6
        %v862 = vrot.slane %v861, 4
        %v869 = vmax.f32 %v839, %v852
        %v870 = vmax.f32 %v840, %v854
        %v871 = vmax.f32 %v841, %v856
        %v872 = vmax.f32 %v842, %v858
        %v873 = vmax.f32 %v843, %v860
        %v874 = vmax.f32 %v844, %v862
        %v875 = vmax.f32 %v869, 0.0
        %v876 = vmax.f32 %v870, 0.0
        %v877 = vmax.f32 %v871, 0.0
        %v878 = vmax.f32 %v872, 0.0
        %v879 = vmax.f32 %v873, 0.0
        %v880 = vmax.f32 %v874, 0.0
        %v888 = vunpack.c.l.s4 1983009808
        %v889 = vunpack.c.0.s8 %v888
        %v890 = vlaneseq
        %v891 = vshrl.u32 %v890, 7
        %v892 = vsub.s32 %v889, %v891
        %v893 = vrot.slane %v875, %v892
        %v895 = vunpack.c.l.s4 1983009808
        %v896 = vunpack.c.0.s8 %v895
        %v897 = vlaneseq
        %v898 = vshrl.u32 %v897, 7
        %v899 = vsub.s32 %v896, %v898
        %v900 = vrot.slane %v876, %v899
        %v902 = vunpack.c.l.s4 1983009808
        %v903 = vunpack.c.0.s8 %v902
        %v904 = vlaneseq
        %v905 = vshrl.u32 %v904, 7
        %v906 = vsub.s32 %v903, %v905
        %v907 = vrot.slane %v877, %v906
        %v909 = vunpack.c.l.s4 1983009808
        %v910 = vunpack.c.0.s8 %v909
        %v911 = vlaneseq
        %v912 = vshrl.u32 %v911, 7
        %v913 = vsub.s32 %v910, %v912
        %v914 = vrot.slane %v878, %v913
        %v916 = vunpack.c.l.s4 1983009808
        %v917 = vunpack.c.0.s8 %v916
        %v918 = vlaneseq
        %v919 = vshrl.u32 %v918, 7
        %v920 = vsub.s32 %v917, %v919
        %v921 = vrot.slane %v879, %v920
        %v923 = vunpack.c.l.s4 1983009808
        %v924 = vunpack.c.0.s8 %v923
        %v925 = vlaneseq
        %v926 = vshrl.u32 %v925, 7
        %v927 = vsub.s32 %v924, %v926
        %v928 = vrot.slane %v880, %v927
        %v929 = vld [vmem:[%s551] sm:$0xff]
        %v930 = vld [vmem:[%s551 + $0x8] sm:$0xff]
        %v931 = vld [vmem:[%s551 + $0x10] sm:$0xff]
        %v932 = vld [vmem:[%s551 + $0x18] sm:$0xff]
        %v933 = vld [vmem:[%s551 + $0x20] sm:$0xff]
        %v934 = vld [vmem:[%s551 + $0x28] sm:$0xff]
        %v935 = vld [vmem:[%s551 + $0x30] sm:$0xff]
        %v936 = vld [vmem:[%s551 + $0x38] sm:$0xff]
        %v937 = vld [vmem:[%s551 + $0x40] sm:$0xff]
        %v938 = vld [vmem:[%s551 + $0x48] sm:$0xff]
        %v939 = vld [vmem:[%s551 + $0x50] sm:$0xff]
        %v940 = vld [vmem:[%s551 + $0x58] sm:$0xff]
        %v941 = vld [vmem:[%s551 + $0x60] sm:$0xff]
        %v942 = vld [vmem:[%s551 + $0x68] sm:$0xff]
        %v943 = vld [vmem:[%s551 + $0x70] sm:$0xff]
        %v944 = vld [vmem:[%s551 + $0x78] sm:$0xff]
        %v945 = vld [vmem:[%s551 + $0x80] sm:$0xff]
        %v946 = vld [vmem:[%s551 + $0x88] sm:$0xff]
        %v947 = vld [vmem:[%s551 + $0x90] sm:$0xff]
        %v948 = vld [vmem:[%s551 + $0x98] sm:$0xff]
        %v949 = vld [vmem:[%s551 + $0xa0] sm:$0xff]
        %v950 = vld [vmem:[%s551 + $0xa8] sm:$0xff]
        %v951 = vld [vmem:[%s551 + $0xb0] sm:$0xff]
        %v952 = vld [vmem:[%s551 + $0xb8] sm:$0xff]
        %v953 = vld [vmem:[%s551 + $0xc0] sm:$0xff]
        %v954 = vld [vmem:[%s551 + $0xc8] sm:$0xff]
        %v955 = vld [vmem:[%s551 + $0xd0] sm:$0xff]
        %v956 = vld [vmem:[%s551 + $0xd8] sm:$0xff]
        %v957 = vld [vmem:[%s551 + $0xe0] sm:$0xff]
        %v958 = vld [vmem:[%s551 + $0xe8] sm:$0xff]
        %v959 = vld [vmem:[%s551 + $0xf0] sm:$0xff]
        %v960 = vld [vmem:[%s551 + $0xf8] sm:$0xff]
        %v961 = vld [vmem:[%s551 + $0x100] sm:$0xff]
        %v962 = vld [vmem:[%s551 + $0x108] sm:$0xff]
        %v963 = vld [vmem:[%s551 + $0x110] sm:$0xff]
        %v964 = vld [vmem:[%s551 + $0x118] sm:$0xff]
        %v965 = vld [vmem:[%s551 + $0x120] sm:$0xff]
        %v966 = vld [vmem:[%s551 + $0x128] sm:$0xff]
        %v967 = vld [vmem:[%s551 + $0x130] sm:$0xff]
        %v968 = vld [vmem:[%s551 + $0x138] sm:$0xff]
        %v969 = vld [vmem:[%s551 + $0x140] sm:$0xff]
        %v970 = vld [vmem:[%s551 + $0x148] sm:$0xff]
        %v971 = vld [vmem:[%s551 + $0x150] sm:$0xff]
        %v972 = vld [vmem:[%s551 + $0x158] sm:$0xff]
        %v973 = vld [vmem:[%s551 + $0x160] sm:$0xff]
        %v974 = vld [vmem:[%s551 + $0x168] sm:$0xff]
        %v975 = vld [vmem:[%s551 + $0x170] sm:$0xff]
        %v976 = vld [vmem:[%s551 + $0x178] sm:$0xff]
        %v977 = vld [vmem:[%s551 + $0x180] sm:$0xff]
        %v978 = vld [vmem:[%s551 + $0x188] sm:$0xff]
        %v979 = vld [vmem:[%s551 + $0x190] sm:$0xff]
        %v980 = vld [vmem:[%s551 + $0x198] sm:$0xff]
        %v981 = vld [vmem:[%s551 + $0x1a0] sm:$0xff]
        %v982 = vld [vmem:[%s551 + $0x1a8] sm:$0xff]
        %v983 = vld [vmem:[%s551 + $0x1b0] sm:$0xff]
        %v984 = vld [vmem:[%s551 + $0x1b8] sm:$0xff]
        %v985 = vld [vmem:[%s551 + $0x1c0] sm:$0xff]
        %v986 = vld [vmem:[%s551 + $0x1c8] sm:$0xff]
        %v987 = vld [vmem:[%s551 + $0x1d0] sm:$0xff]
        %v988 = vld [vmem:[%s551 + $0x1d8] sm:$0xff]
        %v989 = vld [vmem:[%s551 + $0x1e0] sm:$0xff]
        %v990 = vld [vmem:[%s551 + $0x1e8] sm:$0xff]
        %v991 = vld [vmem:[%s551 + $0x1f0] sm:$0xff]
        %v992 = vld [vmem:[%s551 + $0x1f8] sm:$0xff]
        %v993 = vld [vmem:[%s551 + $0x200] sm:$0xff]
        %v994 = vld [vmem:[%s551 + $0x208] sm:$0xff]
        %v995 = vld [vmem:[%s551 + $0x210] sm:$0xff]
        %v996 = vld [vmem:[%s551 + $0x218] sm:$0xff]
        %v997 = vld [vmem:[%s551 + $0x220] sm:$0xff]
        %v998 = vld [vmem:[%s551 + $0x228] sm:$0xff]
        %v999 = vld [vmem:[%s551 + $0x230] sm:$0xff]
        %v1000 = vld [vmem:[%s551 + $0x238] sm:$0xff]
        %v1001 = vcombine.low %v900, %v907
        %v1002 = vcombine.low %v914, %v921
        %v1004 = vunpack.c.l.s4 1983009808
        %v1005 = vunpack.c.0.s8 %v1004
        %v1006 = vlaneseq
        %v1007 = vshrl.u32 %v1006, 7
        %v1008 = vsub.s32 %v1005, %v1007
        %v1009 = vrot.slane %v1001, %v1008
        %v1011 = vunpack.c.l.s4 1983009808
        %v1012 = vunpack.c.0.s8 %v1011
        %v1013 = vlaneseq
        %v1014 = vshrl.u32 %v1013, 7
        %v1015 = vsub.s32 %v1012, %v1014
        %v1016 = vrot.slane %v1002, %v1015
        %v1017 = vcombine.low %v1009, %v1016
        %v1018 = vcombine.high %v1009, %v1016
        %v1020 = vsel %vm817, %v1018, 0
        %1022 = vmatprep.subr.mxu0 0.0
        %1023 = vmatpush1.msra.mxu0 %v953
        %1024 = vmatprep.subr.mxu0 0.0
        %1025 = vmatpush1.msra.mxu0 %v954
        %1026 = vmatprep.subr.mxu0 0.0
        %1027 = vmatpush1.msra.mxu0 %v955
        %1028 = vmatprep.subr.mxu0 0.0
        %1029 = vmatpush1.msra.mxu0 %v956
        %1030 = vmatprep.subr.mxu0 0.0
        %1031 = vmatpush1.msra.mxu0 %v957
        %1032 = vmatprep.subr.mxu0 0.0
        %1033 = vmatpush1.msra.mxu0 %v958
        %1034 = vmatprep.subr.mxu0 0.0
        %1035 = vmatpush1.msra.mxu0 %v959
        %1036 = vmatprep.subr.mxu0 0.0
        %1037 = vmatpush1.msra.mxu0 %v960
        %1038 = vmatprep.subr.mxu0 0.0
        %1039 = vmatpush1.msra.mxu0 %v961
        %1040 = vmatprep.subr.mxu0 0.0
        %1041 = vmatpush1.msra.mxu0 %v962
        %1042 = vmatprep.subr.mxu0 0.0
        %1043 = vmatpush1.msra.mxu0 %v963
        %1044 = vmatprep.subr.mxu0 0.0
        %1045 = vmatpush1.msra.mxu0 %v964
        %1046 = vmatprep.subr.mxu0 0.0
        %1047 = vmatpush1.msra.mxu0 %v965
        %1048 = vmatprep.subr.mxu0 0.0
        %1049 = vmatpush1.msra.mxu0 %v966
        %1050 = vmatprep.subr.mxu0 0.0
        %1051 = vmatpush1.msra.mxu0 %v967
        %1052 = vmatprep.subr.mxu0 0.0
        %1053 = vmatpush1.msra.mxu0 %v968
        %1054 = vmatprep.subr.mxu0 0.0
        %1055 = vmatpush1.msra.mxu0 %v969
        %1056 = vmatprep.subr.mxu0 0.0
        %1057 = vmatpush1.msra.mxu0 %v970
        %1058 = vmatprep.subr.mxu0 0.0
        %1059 = vmatpush1.msra.mxu0 %v971
        %1060 = vmatprep.subr.mxu0 0.0
        %1061 = vmatpush1.msra.mxu0 %v972
        %1062 = vmatprep.subr.mxu0 0.0
        %1063 = vmatpush1.msra.mxu0 %v973
        %1064 = vmatprep.subr.mxu0 0.0
        %1065 = vmatpush1.msra.mxu0 %v974
        %1066 = vmatprep.subr.mxu0 0.0
        %1067 = vmatpush1.msra.mxu0 %v975
        %1068 = vmatprep.subr.mxu0 0.0
        %1069 = vmatpush1.msra.mxu0 %v976
        %1070 = vmatprep.subr.mxu0 0.0
        %1071 = vmatpush1.msra.mxu0 0.0
        %1072 = vmatprep.subr.mxu0 0.0
        %1073 = vmatpush1.msra.mxu0 0.0
        %1074 = vmatprep.subr.mxu0 0.0
        %1075 = vmatpush1.msra.mxu0 0.0
        %1076 = vmatprep.subr.mxu0 0.0
        %1077 = vmatpush1.msra.mxu0 0.0
        %1078 = vmatprep.subr.mxu0 0.0
        %1079 = vmatpush1.msra.mxu0 0.0
        %1080 = vmatprep.subr.mxu0 0.0
        %1081 = vmatpush1.msra.mxu0 0.0
        %1082 = vmatprep.subr.mxu0 0.0
        %1083 = vmatpush1.msra.mxu0 0.0
        %1084 = vmatprep.subr.mxu0 0.0
        %1085 = vmatpush1.msra.mxu0 0.0
        %1086 = vmatprep.mubr.f32.mxu0 %v1020
        %1087 = vmatmul.mubr.f32.gmra.mrb[0].mxu0 %v1017
        %v1088 = vpop.f32.mrb[0].mxu0
        %v1089 = vadd.f32 0.0, %v1088
        %v1090 = vpop.f32.mrb[0].mxu0
        %1091 = vdwg.mxu0
        %v1092 = vcombine.low %v893, %v900
        %v1093 = vcombine.low %v907, %v914
        %v1095 = vunpack.c.l.s4 1983009808
        %v1096 = vunpack.c.0.s8 %v1095
        %v1097 = vlaneseq
        %v1098 = vshrl.u32 %v1097, 7
        %v1099 = vsub.s32 %v1096, %v1098
        %v1100 = vrot.slane %v1092, %v1099
        %v1102 = vunpack.c.l.s4 1983009808
        %v1103 = vunpack.c.0.s8 %v1102
        %v1104 = vlaneseq
        %v1105 = vshrl.u32 %v1104, 7
        %v1106 = vsub.s32 %v1103, %v1105
        %v1107 = vrot.slane %v1093, %v1106
        %v1108 = vcombine.low %v1100, %v1107
        %v1109 = vcombine.high %v1100, %v1107
        %v1111 = vsel %vm817, %v1109, 0
        %1113 = vmatprep.subr.mxu0 0.0
        %1114 = vmatpush1.msra.mxu0 %v929
        %1115 = vmatprep.subr.mxu0 0.0
        %1116 = vmatpush1.msra.mxu0 %v930
        %1117 = vmatprep.subr.mxu0 0.0
        %1118 = vmatpush1.msra.mxu0 %v931
        %1119 = vmatprep.subr.mxu0 0.0
        %1120 = vmatpush1.msra.mxu0 %v932
        %1121 = vmatprep.subr.mxu0 0.0
        %1122 = vmatpush1.msra.mxu0 %v933
        %1123 = vmatprep.subr.mxu0 0.0
        %1124 = vmatpush1.msra.mxu0 %v934
        %1125 = vmatprep.subr.mxu0 0.0
        %1126 = vmatpush1.msra.mxu0 %v935
        %1127 = vmatprep.subr.mxu0 0.0
        %1128 = vmatpush1.msra.mxu0 %v936
        %1129 = vmatprep.subr.mxu0 0.0
        %1130 = vmatpush1.msra.mxu0 %v937
        %1131 = vmatprep.subr.mxu0 0.0
        %1132 = vmatpush1.msra.mxu0 %v938
        %1133 = vmatprep.subr.mxu0 0.0
        %1134 = vmatpush1.msra.mxu0 %v939
        %1135 = vmatprep.subr.mxu0 0.0
        %1136 = vmatpush1.msra.mxu0 %v940
        %1137 = vmatprep.subr.mxu0 0.0
        %1138 = vmatpush1.msra.mxu0 %v941
        %1139 = vmatprep.subr.mxu0 0.0
        %1140 = vmatpush1.msra.mxu0 %v942
        %1141 = vmatprep.subr.mxu0 0.0
        %1142 = vmatpush1.msra.mxu0 %v943
        %1143 = vmatprep.subr.mxu0 0.0
        %1144 = vmatpush1.msra.mxu0 %v944
        %1145 = vmatprep.subr.mxu0 0.0
        %1146 = vmatpush1.msra.mxu0 %v945
        %1147 = vmatprep.subr.mxu0 0.0
        %1148 = vmatpush1.msra.mxu0 %v946
        %1149 = vmatprep.subr.mxu0 0.0
        %1150 = vmatpush1.msra.mxu0 %v947
        %1151 = vmatprep.subr.mxu0 0.0
        %1152 = vmatpush1.msra.mxu0 %v948
        %1153 = vmatprep.subr.mxu0 0.0
        %1154 = vmatpush1.msra.mxu0 %v949
        %1155 = vmatprep.subr.mxu0 0.0
        %1156 = vmatpush1.msra.mxu0 %v950
        %1157 = vmatprep.subr.mxu0 0.0
        %1158 = vmatpush1.msra.mxu0 %v951
        %1159 = vmatprep.subr.mxu0 0.0
        %1160 = vmatpush1.msra.mxu0 %v952
        %1161 = vmatprep.subr.mxu0 0.0
        %1162 = vmatpush1.msra.mxu0 0.0
        %1163 = vmatprep.subr.mxu0 0.0
        %1164 = vmatpush1.msra.mxu0 0.0
        %1165 = vmatprep.subr.mxu0 0.0
        %1166 = vmatpush1.msra.mxu0 0.0
        %1167 = vmatprep.subr.mxu0 0.0
        %1168 = vmatpush1.msra.mxu0 0.0
        %1169 = vmatprep.subr.mxu0 0.0
        %1170 = vmatpush1.msra.mxu0 0.0
        %1171 = vmatprep.subr.mxu0 0.0
        %1172 = vmatpush1.msra.mxu0 0.0
        %1173 = vmatprep.subr.mxu0 0.0
        %1174 = vmatpush1.msra.mxu0 0.0
        %1175 = vmatprep.subr.mxu0 0.0
        %1176 = vmatpush1.msra.mxu0 0.0
        %1177 = vmatprep.mubr.f32.mxu0 %v1111
        %1178 = vmatmul.mubr.f32.gmra.mrb[0].mxu0 %v1108
        %v1179 = vpop.f32.mrb[0].mxu0
        %v1180 = vadd.f32 %v1089, %v1179
        %v1181 = vpop.f32.mrb[0].mxu0
        %1182 = vdwg.mxu0
        %v1183 = vcombine.low %v921, %v928
        %v1185 = vunpack.c.l.s4 1983009808
        %v1186 = vunpack.c.0.s8 %v1185
        %v1187 = vlaneseq
        %v1188 = vshrl.u32 %v1187, 7
        %v1189 = vsub.s32 %v1186, %v1188
        %v1190 = vrot.slane %v1183, %v1189
        %v1191 = vcombine.low %v1107, %v1190
        %v1192 = vcombine.high %v1107, %v1190
        %v1194 = vsel %vm817, %v1192, 0
        %1196 = vmatprep.subr.mxu0 0.0
        %1197 = vmatpush1.msra.mxu0 %v977
        %1198 = vmatprep.subr.mxu0 0.0
        %1199 = vmatpush1.msra.mxu0 %v978
        %1200 = vmatprep.subr.mxu0 0.0
        %1201 = vmatpush1.msra.mxu0 %v979
        %1202 = vmatprep.subr.mxu0 0.0
        %1203 = vmatpush1.msra.mxu0 %v980
        %1204 = vmatprep.subr.mxu0 0.0
        %1205 = vmatpush1.msra.mxu0 %v981
        %1206 = vmatprep.subr.mxu0 0.0
        %1207 = vmatpush1.msra.mxu0 %v982
        %1208 = vmatprep.subr.mxu0 0.0
        %1209 = vmatpush1.msra.mxu0 %v983
        %1210 = vmatprep.subr.mxu0 0.0
        %1211 = vmatpush1.msra.mxu0 %v984
        %1212 = vmatprep.subr.mxu0 0.0
        %1213 = vmatpush1.msra.mxu0 %v985
        %1214 = vmatprep.subr.mxu0 0.0
        %1215 = vmatpush1.msra.mxu0 %v986
        %1216 = vmatprep.subr.mxu0 0.0
        %1217 = vmatpush1.msra.mxu0 %v987
        %1218 = vmatprep.subr.mxu0 0.0
        %1219 = vmatpush1.msra.mxu0 %v988
        %1220 = vmatprep.subr.mxu0 0.0
        %1221 = vmatpush1.msra.mxu0 %v989
        %1222 = vmatprep.subr.mxu0 0.0
        %1223 = vmatpush1.msra.mxu0 %v990
        %1224 = vmatprep.subr.mxu0 0.0
        %1225 = vmatpush1.msra.mxu0 %v991
        %1226 = vmatprep.subr.mxu0 0.0
        %1227 = vmatpush1.msra.mxu0 %v992
        %1228 = vmatprep.subr.mxu0 0.0
        %1229 = vmatpush1.msra.mxu0 %v993
        %1230 = vmatprep.subr.mxu0 0.0
        %1231 = vmatpush1.msra.mxu0 %v994
        %1232 = vmatprep.subr.mxu0 0.0
        %1233 = vmatpush1.msra.mxu0 %v995
        %1234 = vmatprep.subr.mxu0 0.0
        %1235 = vmatpush1.msra.mxu0 %v996
        %1236 = vmatprep.subr.mxu0 0.0
        %1237 = vmatpush1.msra.mxu0 %v997
        %1238 = vmatprep.subr.mxu0 0.0
        %1239 = vmatpush1.msra.mxu0 %v998
        %1240 = vmatprep.subr.mxu0 0.0
        %1241 = vmatpush1.msra.mxu0 %v999
        %1242 = vmatprep.subr.mxu0 0.0
        %1243 = vmatpush1.msra.mxu0 %v1000
        %1244 = vmatprep.subr.mxu0 0.0
        %1245 = vmatpush1.msra.mxu0 0.0
        %1246 = vmatprep.subr.mxu0 0.0
        %1247 = vmatpush1.msra.mxu0 0.0
        %1248 = vmatprep.subr.mxu0 0.0
        %1249 = vmatpush1.msra.mxu0 0.0
        %1250 = vmatprep.subr.mxu0 0.0
        %1251 = vmatpush1.msra.mxu0 0.0
        %1252 = vmatprep.subr.mxu0 0.0
        %1253 = vmatpush1.msra.mxu0 0.0
        %1254 = vmatprep.subr.mxu0 0.0
        %1255 = vmatpush1.msra.mxu0 0.0
        %1256 = vmatprep.subr.mxu0 0.0
        %1257 = vmatpush1.msra.mxu0 0.0
        %1258 = vmatprep.subr.mxu0 0.0
        %1259 = vmatpush1.msra.mxu0 0.0
        %1260 = vmatprep.mubr.f32.mxu0 %v1194
        %1261 = vmatmul.mubr.f32.gmra.mrb[0].mxu0 %v1191
        %v1262 = vpop.f32.mrb[0].mxu0
        %v1263 = vadd.f32 0.0, %v1262
        %v1264 = vpop.f32.mrb[0].mxu0
        %1265 = vdwg.mxu0
        %v1266 = vadd.f32 %v1180, %v1263
        %v1267 = vld [vmem:[%s554] sm:$0x1]
        %v1269 = vlaneseq
        %v1270 = vshrl.u32 %v1269, 7
        %v1271 = vsub.s32 0, %v1270
        %v1272 = vrot.slane %v1267, %v1271
        %v1274 = vadd.f32 %v1266, %v1272
        %1276 = vrot.lane.b32.xlu0 %v1274, 64
        %v1277 = vpop.permute.xlu0 %1276
        %v1279 = vmax.f32 %v1274, %v1277
        %v1281 = vcombine.high %v1279, %v1279
        %v1283 = vrot.slane %v1279, 6
        %v1284 = vrot.slane %v1283, 4
        %v1285 = vrot.slane %v1281, 6
        %v1286 = vrot.slane %v1285, 4
        %v1289 = vmax.f32 %v1279, %v1284
        %v1290 = vmax.f32 %v1281, %v1286
        %v1291 = vmax.f32 %v1289, 0.0
        %v1292 = vmax.f32 %v1290, 0.0
        %v1293 = vld [vmem:[%s454] sm:$0xff]
        %v1294 = vld [vmem:[%s454 + $0x8] sm:$0xff]
        %v1295 = vld [vmem:[%s454 + $0x10] sm:$0xff]
        %v1296 = vld [vmem:[%s454 + $0x18] sm:$0xff]
        %v1297 = vld [vmem:[%s454 + $0x20] sm:$0xff]
        %v1298 = vld [vmem:[%s454 + $0x28] sm:$0xff]
        %v1299 = vld [vmem:[%s454 + $0x30] sm:$0xff]
        %v1300 = vld [vmem:[%s454 + $0x38] sm:$0xff]
        %v1301 = vld [vmem:[%s454 + $0x40] sm:$0xff]
        %v1302 = vld [vmem:[%s454 + $0x48] sm:$0xff]
        %v1303 = vld [vmem:[%s454 + $0x50] sm:$0xff]
        %v1304 = vld [vmem:[%s454 + $0x58] sm:$0xff]
        %v1305 = vld [vmem:[%s454 + $0x60] sm:$0xff]
        %v1306 = vld [vmem:[%s454 + $0x68] sm:$0xff]
        %v1307 = vld [vmem:[%s454 + $0x70] sm:$0xff]
        %v1308 = vld [vmem:[%s454 + $0x78] sm:$0xff]
        %v1310 = vsel %vm817, %v1292, 0
        %1312 = vmatprep.subr.mxu0 0.0
        %1313 = vmatpush1.msra.mxu0 %v1301
        %1314 = vmatprep.subr.mxu0 0.0
        %1315 = vmatpush1.msra.mxu0 %v1302
        %1316 = vmatprep.subr.mxu0 0.0
        %1317 = vmatpush1.msra.mxu0 %v1303
        %1318 = vmatprep.subr.mxu0 0.0
        %1319 = vmatpush1.msra.mxu0 %v1304
        %1320 = vmatprep.subr.mxu0 0.0
        %1321 = vmatpush1.msra.mxu0 %v1305
        %1322 = vmatprep.subr.mxu0 0.0
        %1323 = vmatpush1.msra.mxu0 %v1306
        %1324 = vmatprep.subr.mxu0 0.0
        %1325 = vmatpush1.msra.mxu0 %v1307
        %1326 = vmatprep.subr.mxu0 0.0
        %1327 = vmatpush1.msra.mxu0 %v1308
        %1328 = vmatprep.subr.mxu0 0.0
        %1329 = vmatpush1.msra.mxu0 0.0
        %1330 = vmatprep.subr.mxu0 0.0
        %1331 = vmatpush1.msra.mxu0 0.0
        %1332 = vmatprep.subr.mxu0 0.0
        %1333 = vmatpush1.msra.mxu0 0.0
        %1334 = vmatprep.subr.mxu0 0.0
        %1335 = vmatpush1.msra.mxu0 0.0
        %1336 = vmatprep.subr.mxu0 0.0
        %1337 = vmatpush1.msra.mxu0 0.0
        %1338 = vmatprep.subr.mxu0 0.0
        %1339 = vmatpush1.msra.mxu0 0.0
        %1340 = vmatprep.subr.mxu0 0.0
        %1341 = vmatpush1.msra.mxu0 0.0
        %1342 = vmatprep.subr.mxu0 0.0
        %1343 = vmatpush1.msra.mxu0 0.0
        %1344 = vmatprep.subr.mxu0 0.0
        %1345 = vmatpush1.msra.mxu0 0.0
        %1346 = vmatprep.subr.mxu0 0.0
        %1347 = vmatpush1.msra.mxu0 0.0
        %1348 = vmatprep.subr.mxu0 0.0
        %1349 = vmatpush1.msra.mxu0 0.0
        %1350 = vmatprep.subr.mxu0 0.0
        %1351 = vmatpush1.msra.mxu0 0.0
        %1352 = vmatprep.subr.mxu0 0.0
        %1353 = vmatpush1.msra.mxu0 0.0
        %1354 = vmatprep.subr.mxu0 0.0
        %1355 = vmatpush1.msra.mxu0 0.0
        %1356 = vmatprep.subr.mxu0 0.0
        %1357 = vmatpush1.msra.mxu0 0.0
        %1358 = vmatprep.subr.mxu0 0.0
        %1359 = vmatpush1.msra.mxu0 0.0
        %1360 = vmatprep.subr.mxu0 0.0
        %1361 = vmatpush1.msra.mxu0 0.0
        %1362 = vmatprep.subr.mxu0 0.0
        %1363 = vmatpush1.msra.mxu0 0.0
        %1364 = vmatprep.subr.mxu0 0.0
        %1365 = vmatpush1.msra.mxu0 0.0
        %1366 = vmatprep.subr.mxu0 0.0
        %1367 = vmatpush1.msra.mxu0 0.0
        %1368 = vmatprep.subr.mxu0 0.0
        %1369 = vmatpush1.msra.mxu0 0.0
        %1370 = vmatprep.subr.mxu0 0.0
        %1371 = vmatpush1.msra.mxu0 0.0
        %1372 = vmatprep.subr.mxu0 0.0
        %1373 = vmatpush1.msra.mxu0 0.0
        %1374 = vmatprep.subr.mxu0 0.0
        %1375 = vmatpush1.msra.mxu0 0.0
        %1376 = vmatprep.mubr.f32.mxu0 0.0
        %1377 = vmatmul.mubr.f32.gmra.mrb[0].mxu0 %v1310
        %v1378 = vpop.f32.mrb[0].mxu0
        %v1379 = vadd.f32 0.0, %v1378
        %v1380 = vpop.f32.mrb[0].mxu0
        %1381 = vdwg.mxu0
        %v1383 = vsel %vm817, %v1291, 0
        %1385 = vmatprep.subr.mxu0 0.0
        %1386 = vmatpush1.msra.mxu0 %v1293
        %1387 = vmatprep.subr.mxu0 0.0
        %1388 = vmatpush1.msra.mxu0 %v1294
        %1389 = vmatprep.subr.mxu0 0.0
        %1390 = vmatpush1.msra.mxu0 %v1295
        %1391 = vmatprep.subr.mxu0 0.0
        %1392 = vmatpush1.msra.mxu0 %v1296
        %1393 = vmatprep.subr.mxu0 0.0
        %1394 = vmatpush1.msra.mxu0 %v1297
        %1395 = vmatprep.subr.mxu0 0.0
        %1396 = vmatpush1.msra.mxu0 %v1298
        %1397 = vmatprep.subr.mxu0 0.0
        %1398 = vmatpush1.msra.mxu0 %v1299
        %1399 = vmatprep.subr.mxu0 0.0
        %1400 = vmatpush1.msra.mxu0 %v1300
        %1401 = vmatprep.subr.mxu0 0.0
        %1402 = vmatpush1.msra.mxu0 0.0
        %1403 = vmatprep.subr.mxu0 0.0
        %1404 = vmatpush1.msra.mxu0 0.0
        %1405 = vmatprep.subr.mxu0 0.0
        %1406 = vmatpush1.msra.mxu0 0.0
        %1407 = vmatprep.subr.mxu0 0.0
        %1408 = vmatpush1.msra.mxu0 0.0
        %1409 = vmatprep.subr.mxu0 0.0
        %1410 = vmatpush1.msra.mxu0 0.0
        %1411 = vmatprep.subr.mxu0 0.0
        %1412 = vmatpush1.msra.mxu0 0.0
        %1413 = vmatprep.subr.mxu0 0.0
        %1414 = vmatpush1.msra.mxu0 0.0
        %1415 = vmatprep.subr.mxu0 0.0
        %1416 = vmatpush1.msra.mxu0 0.0
        %1417 = vmatprep.subr.mxu0 0.0
        %1418 = vmatpush1.msra.mxu0 0.0
        %1419 = vmatprep.subr.mxu0 0.0
        %1420 = vmatpush1.msra.mxu0 0.0
        %1421 = vmatprep.subr.mxu0 0.0
        %1422 = vmatpush1.msra.mxu0 0.0
        %1423 = vmatprep.subr.mxu0 0.0
        %1424 = vmatpush1.msra.mxu0 0.0
        %1425 = vmatprep.subr.mxu0 0.0
        %1426 = vmatpush1.msra.mxu0 0.0
        %1427 = vmatprep.subr.mxu0 0.0
        %1428 = vmatpush1.msra.mxu0 0.0
        %1429 = vmatprep.subr.mxu0 0.0
        %1430 = vmatpush1.msra.mxu0 0.0
        %1431 = vmatprep.subr.mxu0 0.0
        %1432 = vmatpush1.msra.mxu0 0.0
        %1433 = vmatprep.subr.mxu0 0.0
        %1434 = vmatpush1.msra.mxu0 0.0
        %1435 = vmatprep.subr.mxu0 0.0
        %1436 = vmatpush1.msra.mxu0 0.0
        %1437 = vmatprep.subr.mxu0 0.0
        %1438 = vmatpush1.msra.mxu0 0.0
        %1439 = vmatprep.subr.mxu0 0.0
        %1440 = vmatpush1.msra.mxu0 0.0
        %1441 = vmatprep.subr.mxu0 0.0
        %1442 = vmatpush1.msra.mxu0 0.0
        %1443 = vmatprep.subr.mxu0 0.0
        %1444 = vmatpush1.msra.mxu0 0.0
        %1445 = vmatprep.subr.mxu0 0.0
        %1446 = vmatpush1.msra.mxu0 0.0
        %1447 = vmatprep.subr.mxu0 0.0
        %1448 = vmatpush1.msra.mxu0 0.0
        %1449 = vmatprep.mubr.f32.mxu0 0.0
        %1450 = vmatmul.mubr.f32.gmra.mrb[0].mxu0 %v1383
        %v1451 = vpop.f32.mrb[0].mxu0
        %v1452 = vadd.f32 %v1379, %v1451
        %v1453 = vpop.f32.mrb[0].mxu0
        %1454 = vdwg.mxu0
        %v1455 = vld [vmem:[%s557] sm:$0x1]
        %v1457 = vlaneseq
        %v1458 = vshrl.u32 %v1457, 7
        %v1459 = vsub.s32 0, %v1458
        %v1460 = vrot.slane %v1455, %v1459
        %v1462 = vadd.f32 %v1452, %v1460
        %v1463 = vmax.f32 %v1462, 0.0
        %v1464 = vld [vmem:[%s562] sm:$0xff]
        %v1465 = vld [vmem:[%s562 + $0x8] sm:$0xff]
        %v1466 = vld [vmem:[%s562 + $0x10] sm:$0xff]
        %v1467 = vld [vmem:[%s562 + $0x18] sm:$0xff]
        %v1468 = vld [vmem:[%s562 + $0x20] sm:$0xff]
        %v1469 = vld [vmem:[%s562 + $0x28] sm:$0xff]
        %v1470 = vld [vmem:[%s562 + $0x30] sm:$0xff]
        %v1471 = vld [vmem:[%s562 + $0x38] sm:$0xff]
        %v1472 = vld [vmem:[%s565] sm:$0x1]
        %v1474 = vlaneseq
        %v1475 = vshrl.u32 %v1474, 7
        %v1476 = vsub.s32 0, %v1475
        %v1477 = vrot.slane %v1472, %v1476
        %v1480 = vsel %vm817, %v1463, 0
        %1482 = vmatprep.subr.mxu0 0.0
        %1483 = vmatpush1.msra.mxu0 %v1464
        %1484 = vmatprep.subr.mxu0 0.0
        %1485 = vmatpush1.msra.mxu0 %v1465
        %1486 = vmatprep.subr.mxu0 0.0
        %1487 = vmatpush1.msra.mxu0 %v1466
        %1488 = vmatprep.subr.mxu0 0.0
        %1489 = vmatpush1.msra.mxu0 %v1467
        %1490 = vmatprep.subr.mxu0 0.0
        %1491 = vmatpush1.msra.mxu0 %v1468
        %1492 = vmatprep.subr.mxu0 0.0
        %1493 = vmatpush1.msra.mxu0 %v1469
        %1494 = vmatprep.subr.mxu0 0.0
        %1495 = vmatpush1.msra.mxu0 %v1470
        %1496 = vmatprep.subr.mxu0 0.0
        %1497 = vmatpush1.msra.mxu0 %v1471
        %1498 = vmatprep.subr.mxu0 0.0
        %1499 = vmatpush1.msra.mxu0 0.0
        %1500 = vmatprep.subr.mxu0 0.0
        %1501 = vmatpush1.msra.mxu0 0.0
        %1502 = vmatprep.subr.mxu0 0.0
        %1503 = vmatpush1.msra.mxu0 0.0
        %1504 = vmatprep.subr.mxu0 0.0
        %1505 = vmatpush1.msra.mxu0 0.0
        %1506 = vmatprep.subr.mxu0 0.0
        %1507 = vmatpush1.msra.mxu0 0.0
        %1508 = vmatprep.subr.mxu0 0.0
        %1509 = vmatpush1.msra.mxu0 0.0
        %1510 = vmatprep.subr.mxu0 0.0
        %1511 = vmatpush1.msra.mxu0 0.0
        %1512 = vmatprep.subr.mxu0 0.0
        %1513 = vmatpush1.msra.mxu0 0.0
        %1514 = vmatprep.subr.mxu0 0.0
        %1515 = vmatpush1.msra.mxu0 0.0
        %1516 = vmatprep.subr.mxu0 0.0
        %1517 = vmatpush1.msra.mxu0 0.0
        %1518 = vmatprep.subr.mxu0 0.0
        %1519 = vmatpush1.msra.mxu0 0.0
        %1520 = vmatprep.subr.mxu0 0.0
        %1521 = vmatpush1.msra.mxu0 0.0
        %1522 = vmatprep.subr.mxu0 0.0
        %1523 = vmatpush1.msra.mxu0 0.0
        %1524 = vmatprep.subr.mxu0 0.0
        %1525 = vmatpush1.msra.mxu0 0.0
        %1526 = vmatprep.subr.mxu0 0.0
        %1527 = vmatpush1.msra.mxu0 0.0
        %1528 = vmatprep.subr.mxu0 0.0
        %1529 = vmatpush1.msra.mxu0 0.0
        %1530 = vmatprep.subr.mxu0 0.0
        %1531 = vmatpush1.msra.mxu0 0.0
        %1532 = vmatprep.subr.mxu0 0.0
        %1533 = vmatpush1.msra.mxu0 0.0
        %1534 = vmatprep.subr.mxu0 0.0
        %1535 = vmatpush1.msra.mxu0 0.0
        %1536 = vmatprep.subr.mxu0 0.0
        %1537 = vmatpush1.msra.mxu0 0.0
        %1538 = vmatprep.subr.mxu0 0.0
        %1539 = vmatpush1.msra.mxu0 0.0
        %1540 = vmatprep.subr.mxu0 0.0
        %1541 = vmatpush1.msra.mxu0 0.0
        %1542 = vmatprep.subr.mxu0 0.0
        %1543 = vmatpush1.msra.mxu0 0.0
        %1544 = vmatprep.subr.mxu0 0.0
        %1545 = vmatpush1.msra.mxu0 0.0
        %1546 = vmatprep.mubr.f32.mxu0 0.0
        %1547 = vmatmul.mubr.f32.gmra.mrb[0].mxu0 %v1480
        %v1548 = vpop.f32.mrb[0].mxu0
        %v1549 = vadd.f32 %v1477, %v1548
        %v1550 = vpop.f32.mrb[0].mxu0
        %1551 = vdwg.mxu0
        %v1552 = vmax.f32 %v1549, 0.0
        %v1553 = vld [vmem:[%s570] sm:$0xff]
        %v1554 = vld [vmem:[%s570 + $0x8] sm:$0xff]
        %v1555 = vld [vmem:[%s570 + $0x10] sm:$0xff]
        %v1556 = vld [vmem:[%s570 + $0x18] sm:$0xff]
        %v1557 = vld [vmem:[%s570 + $0x20] sm:$0xff]
        %v1558 = vld [vmem:[%s570 + $0x28] sm:$0xff]
        %v1559 = vld [vmem:[%s570 + $0x30] sm:$0xff]
        %v1560 = vld [vmem:[%s570 + $0x38] sm:$0xff]
        %v1561 = vld [vmem:[%s573] sm:$0x1]
        %v1563 = vlaneseq
        %v1564 = vshrl.u32 %v1563, 7
        %v1565 = vsub.s32 0, %v1564
        %v1566 = vrot.slane %v1561, %v1565
        %v1569 = vsel %vm817, %v1552, 0
        %1571 = vmatprep.subr.mxu0 0.0
        %1572 = vmatpush1.msra.mxu0 %v1553
        %1573 = vmatprep.subr.mxu0 0.0
        %1574 = vmatpush1.msra.mxu0 %v1554
        %1575 = vmatprep.subr.mxu0 0.0
        %1576 = vmatpush1.msra.mxu0 %v1555
        %1577 = vmatprep.subr.mxu0 0.0
        %1578 = vmatpush1.msra.mxu0 %v1556
        %1579 = vmatprep.subr.mxu0 0.0
        %1580 = vmatpush1.msra.mxu0 %v1557
        %1581 = vmatprep.subr.mxu0 0.0
        %1582 = vmatpush1.msra.mxu0 %v1558
        %1583 = vmatprep.subr.mxu0 0.0
        %1584 = vmatpush1.msra.mxu0 %v1559
        %1585 = vmatprep.subr.mxu0 0.0
        %1586 = vmatpush1.msra.mxu0 %v1560
        %1587 = vmatprep.subr.mxu0 0.0
        %1588 = vmatpush1.msra.mxu0 0.0
        %1589 = vmatprep.subr.mxu0 0.0
        %1590 = vmatpush1.msra.mxu0 0.0
        %1591 = vmatprep.subr.mxu0 0.0
        %1592 = vmatpush1.msra.mxu0 0.0
        %1593 = vmatprep.subr.mxu0 0.0
        %1594 = vmatpush1.msra.mxu0 0.0
        %1595 = vmatprep.subr.mxu0 0.0
        %1596 = vmatpush1.msra.mxu0 0.0
        %1597 = vmatprep.subr.mxu0 0.0
        %1598 = vmatpush1.msra.mxu0 0.0
        %1599 = vmatprep.subr.mxu0 0.0
        %1600 = vmatpush1.msra.mxu0 0.0
        %1601 = vmatprep.subr.mxu0 0.0
        %1602 = vmatpush1.msra.mxu0 0.0
        %1603 = vmatprep.subr.mxu0 0.0
        %1604 = vmatpush1.msra.mxu0 0.0
        %1605 = vmatprep.subr.mxu0 0.0
        %1606 = vmatpush1.msra.mxu0 0.0
        %1607 = vmatprep.subr.mxu0 0.0
        %1608 = vmatpush1.msra.mxu0 0.0
        %1609 = vmatprep.subr.mxu0 0.0
        %1610 = vmatpush1.msra.mxu0 0.0
        %1611 = vmatprep.subr.mxu0 0.0
        %1612 = vmatpush1.msra.mxu0 0.0
        %1613 = vmatprep.subr.mxu0 0.0
        %1614 = vmatpush1.msra.mxu0 0.0
        %1615 = vmatprep.subr.mxu0 0.0
        %1616 = vmatpush1.msra.mxu0 0.0
        %1617 = vmatprep.subr.mxu0 0.0
        %1618 = vmatpush1.msra.mxu0 0.0
        %1619 = vmatprep.subr.mxu0 0.0
        %1620 = vmatpush1.msra.mxu0 0.0
        %1621 = vmatprep.subr.mxu0 0.0
        %1622 = vmatpush1.msra.mxu0 0.0
        %1623 = vmatprep.subr.mxu0 0.0
        %1624 = vmatpush1.msra.mxu0 0.0
        %1625 = vmatprep.subr.mxu0 0.0
        %1626 = vmatpush1.msra.mxu0 0.0
        %1627 = vmatprep.subr.mxu0 0.0
        %1628 = vmatpush1.msra.mxu0 0.0
        %1629 = vmatprep.subr.mxu0 0.0
        %1630 = vmatpush1.msra.mxu0 0.0
        %1631 = vmatprep.subr.mxu0 0.0
        %1632 = vmatpush1.msra.mxu0 0.0
        %1633 = vmatprep.subr.mxu0 0.0
        %1634 = vmatpush1.msra.mxu0 0.0
        %1635 = vmatprep.mubr.f32.mxu0 0.0
        %1636 = vmatmul.mubr.f32.gmra.mrb[0].mxu0 %v1569
        %v1637 = vpop.f32.mrb[0].mxu0
        %v1638 = vadd.f32 %v1566, %v1637
        %v1639 = vpop.f32.mrb[0].mxu0
        %1640 = vdwg.mxu0
        %vm1641 = vcmask 74752
        %1642 = vst.msk [vmem:[%s577] sm:$0x3] %vm1641, %v1638
        %p1643 = scmp.lt.s32.totalorder %s25, 1
        %s1644 = scalar_select %p1643, %s25, 1
        %s1645 = smul.addr %s1644, 2
        %s1646 = scalar_lea.vmem %s11, %s1645
        // Predicated region
        $region69: #{deep_model_forward.1} parent=63 // pred_check
          %p1647 = pneg %p329
        $region70: #{deep_model_forward.1} parent=63 // pred_check_branch
          %1649 = sbr.rel (%p1647) target = $region72
        $region71: #{deep_model_forward.1} parent=63 // pred_region
          _
        $region72: #{deep_model_forward.1} parent=63 // pred_fallthru
          _
      $region64: #{deep_model_forward.1} parent=5 // pred_fallthru
        _
      %p1650 = scmp.le.s32.totalorder 2, %s20
      // Predicated region
      $region73: #{deep_model_forward.1} parent=5 // pred_check
        %p1651 = pneg %p1650
      $region74: #{deep_model_forward.1} parent=5 // pred_check_branch
        %1653 = sbr.rel (%p1651) target = $region76
      $region75: #{deep_model_forward.1} parent=5 // pred_region
        %s1654 = ssub.s32 %s20, 2
        // Predicated region
        $region77: #{deep_model_forward.1} parent=75 // pred_check
          %p1655 = pneg %p335
        $region78: #{deep_model_forward.1} parent=75 // pred_check_branch
          %1657 = sbr.rel (%p1655) target = $region80
        $region79: #{deep_model_forward.1} parent=75 // pred_region
          %p1658 = scmp.lt.s32.totalorder %s26, 1
          %s1659 = scalar_select %p1658, %s26, 1
          %s1660 = smul.addr %s1659, 2
          %s1661 = scalar_lea.vmem %s11, %s1660
        $region80: #{deep_model_forward.1} parent=75 // pred_fallthru
          _
      $region76: #{deep_model_forward.1} parent=5 // pred_fallthru
        _
    $region6: #{deep_model_forward.1} parent=1 // loop_footer
      %s24 = sadd.s32 1, %s20
    $region7: #{deep_model_forward.1} parent=1 // loop_footer_branch
      %19 = sbr.rel target = $region3
    $region8: #{deep_model_forward.1} parent=1 // loop_exit
      _
    %1662 = vsyncpa [#allocation3], 1
    %s1663 = scalar_lea.sflag [#allocation3], 1
    %1664 = vsyncpa %s1663, 1

</llo_original>
